<compile_context>
chip_gen: v7x
topology: tpu7x:2x2x1
jax: 0.10.0
libtpu: 0.0.40
codegen_flags: <defaults>
</compile_context>

<pallas_src>
import jax
import jax.numpy as jnp
from jax.experimental import pallas as pl
from jax.experimental.pallas import tpu as pltpu


# ----------------------------- shared math helpers -----------------------------
def _layer_norm(x, gamma, beta, eps=1e-5):
    mu = jnp.mean(x, axis=-1, keepdims=True)
    var = jnp.mean((x - mu) ** 2, axis=-1, keepdims=True)
    return (x - mu) * jax.lax.rsqrt(var + eps) * gamma + beta


def _gelu_exact(x):
    # nn.GELU() default (approximate='none'), i.e. erf-based exact GELU
    return 0.5 * x * (1.0 + jax.lax.erf(x * (1.0 / jnp.sqrt(jnp.float32(2.0)))))


# ------------------------- parameter folding / packing -------------------------
def fold_params(params, compute_dtype=jnp.bfloat16):
    """Fold the attention scale and the (oq+oq) doubling into the projection
    weights, cast matmul weights to the compute dtype, keep biases/LN in f32."""
    E = params["wq1"].shape[0]
    scale = float(E) ** -0.5  # head_dim == embed_dim (num_heads = 1)
    cdt = compute_dtype
    return {
        # mHA1: query = key = 2*oq -> fold the 2 into wq1/wk1 (weights only).
        # PyTorch scales q *after* the in-projection (incl. bias) -> fold the
        # scale into wq1 AND bq1.
        "wq1": (params["wq1"] * (2.0 * scale)).astype(cdt),
        "bq1": params["bq1"] * scale,
        "wk1": (params["wk1"] * 2.0).astype(cdt),
        "bk1": params["bk1"],
        "wv1": params["wv1"].astype(cdt), "bv1": params["bv1"],
        "wo1": params["wo1"].astype(cdt), "bo1": params["bo1"],
        # mHA2: query = ln1 + oq (no doubling); fold the scale into wq2/bq2.
        "wq2": (params["wq2"] * scale).astype(cdt),
        "bq2": params["bq2"] * scale,
        "wk2": params["wk2"].astype(cdt), "bk2": params["bk2"],
        "wv2": params["wv2"].astype(cdt), "bv2": params["bv2"],
        "wo2": params["wo2"].astype(cdt), "bo2": params["bo2"],
        "w1": params["w1"].astype(cdt), "b1": params["b1"],
        "w2": params["w2"].astype(cdt), "b2": params["b2"],
        "gamma": params["gamma"], "beta": params["beta"],
    }


def pack_params(folded, lane=128):
    """Pack the many small tensors into a few VMEM slabs and pad the MLP hidden
    dim up to a multiple of 128 lanes (zero padding is a mathematical no-op)."""
    M = folded["w1"].shape[1]
    Mp = ((M + lane - 1) // lane) * lane
    pre_w = jnp.concatenate(
        [folded["wq1"], folded["wk1"], folded["wv1"], folded["wo1"], folded["wq2"]], axis=0)
    pre_b = jnp.concatenate(
        [folded["bq1"], folded["bk1"], folded["bv1"], folded["bo1"], folded["bq2"],
         folded["gamma"], folded["beta"]], axis=0)                      # (7, E) f32
    main_w = jnp.concatenate([folded["wk2"], folded["wv2"], folded["wo2"]], axis=0)  # (3E, E)
    main_b = jnp.concatenate(
        [folded["bk2"], folded["bv2"], folded["bo2"], folded["b2"],
         folded["gamma"], folded["beta"]], axis=0)                      # (6, E) f32
    w1p = jnp.pad(folded["w1"], ((0, 0), (0, Mp - M)))                  # (E, Mp)
    b1p = jnp.pad(folded["b1"], ((0, 0), (0, Mp - M)))                  # (1, Mp)
    w2p = jnp.pad(folded["w2"], ((0, Mp - M), (0, 0)))                  # (Mp, E)
    return dict(pre_w=pre_w, pre_b=pre_b, main_w=main_w, main_b=main_b,
                w1p=w1p, b1p=b1p, w2p=w2p)


# -------------------- kernel 1: batch-invariant precompute ---------------------
def decoder_precompute_kernel(oq_ref, w_ref, b_ref, ln1_ref, q2_ref):
    """mHA1 + first residual LayerNorm + mHA2 q-projection (all depend only on
    the object queries and the weights). Runs once, not per batch block."""
    E = oq_ref.shape[-1]
    cdt = w_ref.dtype
    f32 = jnp.float32

    oq = oq_ref[...]
    wq1 = w_ref[0 * E:1 * E, :]
    wk1 = w_ref[1 * E:2 * E, :]
    wv1 = w_ref[2 * E:3 * E, :]
    wo1 = w_ref[3 * E:4 * E, :]
    wq2 = w_ref[4 * E:5 * E, :]
    bq1 = b_ref[0:1, :]
    bk1 = b_ref[1:2, :]
    bv1 = b_ref[2:3, :]
    bo1 = b_ref[3:4, :]
    bq2 = b_ref[4:5, :]
    gamma = b_ref[5:6, :]
    beta = b_ref[6:7, :]

    oqc = oq.astype(cdt)
    # scale and the "oq + oq" doubling are already folded into wq1/bq1/wk1.
    q1 = jnp.dot(oqc, wq1, preferred_element_type=f32) + bq1
    k1 = jnp.dot(oqc, wk1, preferred_element_type=f32) + bk1
    v1 = jnp.dot(oqc, wv1, preferred_element_type=f32) + bv1

    # QK^T contracting last dims of both (no explicit transpose of k).
    s = jax.lax.dot_general(q1.astype(cdt), k1.astype(cdt),
                            dimension_numbers=(((1,), (1,)), ((), ())),
                            preferred_element_type=f32)
    s = s - jnp.max(s, axis=-1, keepdims=True)
    p = jnp.exp(s)
    p = p * pl.reciprocal(jnp.sum(p, axis=-1, keepdims=True), approx=True)

    attn = jnp.dot(p.astype(cdt), v1.astype(cdt), preferred_element_type=f32)
    mha1 = jnp.dot(attn.astype(cdt), wo1, preferred_element_type=f32) + bo1

    ln1 = _layer_norm(mha1, gamma, beta) + oq
    # mHA2 q-projection (scale already folded into wq2/bq2).
    q2 = jnp.dot((ln1 + oq).astype(cdt), wq2, preferred_element_type=f32) + bq2

    ln1_ref[...] = ln1
    q2_ref[...] = q2


def _precompute_ln1_q2(oq2d, pre_w, pre_b):
    S_q, E = oq2d.shape
    return pl.pallas_call(
        decoder_precompute_kernel,
        out_shape=(jax.ShapeDtypeStruct((S_q, E), jnp.float32),
                   jax.ShapeDtypeStruct((S_q, E), jnp.float32)),
        grid_spec=pltpu.PrefetchScalarGridSpec(
            num_scalar_prefetch=0,
            grid=(1,),
            in_specs=[
                pl.BlockSpec((S_q, E), lambda i: (0, 0)),
                pl.BlockSpec(pre_w.shape, lambda i: (0, 0)),
                pl.BlockSpec(pre_b.shape, lambda i: (0, 0)),
            ],
            out_specs=[
                pl.BlockSpec((S_q, E), lambda i: (0, 0)),
                pl.BlockSpec((S_q, E), lambda i: (0, 0)),
            ],
        ),
        compiler_params=pltpu.CompilerParams(dimension_semantics=("arbitrary",)),
    )(oq2d, pre_w, pre_b)


# ---------------------- kernel 2: per-batch-block main pass --------------------
def decoder_main_kernel(q2_ref, ln1_ref, enc_ref, pos_ref, w_ref, b_ref,
                        w1_ref, b1_ref, w2_ref, out_ref):
    Bb, S_kv, E = enc_ref.shape
    S_qp = q2_ref.shape[0]
    cdt = w_ref.dtype
    f32 = jnp.float32

    wk = w_ref[0 * E:1 * E, :]
    wv = w_ref[1 * E:2 * E, :]
    wo = w_ref[2 * E:3 * E, :]
    bk = b_ref[0:1, :]
    bv = b_ref[1:2, :]
    bo = b_ref[2:3, :]
    b2 = b_ref[3:4, :]
    gamma = b_ref[4:5, :]
    beta = b_ref[5:6, :]

    def project(x, w, b):
        # Flatten (Bb, S, Din) -> (Bb*S, Din) so the MXU sees many rows at once.
        lead = x.shape[:-1]
        y = jnp.dot(x.reshape(-1, x.shape[-1]).astype(cdt), w,
                    preferred_element_type=f32) + b
        return y.reshape(lead + (w.shape[1],))

    enc = enc_ref[...]                                   # (Bb, S_kv, E) f32
    k = project(pos_ref[...] + enc, wk, bk)              # (Bb, S_kv, E)
    v = project(enc, wv, bv)                             # (Bb, S_kv, E)

    # Shared, pre-scaled query rows (batch-invariant, computed once upstream).
    q2 = jnp.broadcast_to(q2_ref[...].astype(cdt), (Bb, S_qp, E))
    s = jnp.einsum('bqd,bkd->bqk', q2, k.astype(cdt), preferred_element_type=f32)
    s = s - jnp.max(s, axis=-1, keepdims=True)
    p = jnp.exp(s)
    p = p * pl.reciprocal(jnp.sum(p, axis=-1, keepdims=True), approx=True)
    o = jnp.einsum('bqk,bkd->bqd', p.astype(cdt), v.astype(cdt),
                   preferred_element_type=f32)           # (Bb, S_qp, E)

    mha2 = project(o, wo, bo)                            # (Bb, S_qp, E)
    ln2 = _layer_norm(mha2, gamma, beta) + ln1_ref[...]  # ln1 broadcasts over batch

    h = _gelu_exact(project(ln2, w1_ref[...], b1_ref[...]))
    mlp1 = project(h, w2_ref[...], b2)

    out_ref[...] = (_layer_norm(mlp1, gamma, beta) + ln2).astype(out_ref.dtype)


# ---------------------------------- wrapper -------------------------------------
def decoder_layer(encoder_output, positional_encoding, object_queries, params,
                  *, compute_dtype=jnp.bfloat16, block_b=8):
    B, S_kv, E = encoder_output.shape
    S_q = object_queries.shape[-2]

    folded = fold_params(params, compute_dtype)
    packed = pack_params(folded)

    # The module shares one set of (zero) object queries across the batch.
    oq2d = object_queries[0].astype(jnp.float32)
    ln1, q2s = _precompute_ln1_q2(oq2d, packed["pre_w"], packed["pre_b"])

    # Pad S_q (10) up to a sublane multiple (16): lane/sublane-dense activations
    # and unmasked output stores; padded rows are sliced off below.
    S_qp = ((S_q + 7) // 8) * 8
    pad = ((0, S_qp - S_q), (0, 0))
    ln1p = jnp.pad(ln1, pad)
    q2p = jnp.pad(q2s, pad)

    # Choose the largest batch block <= block_b that divides B.
    bb = max(1, min(block_b, B))
    while B % bb:
        bb -= 1

    out = pl.pallas_call(
        decoder_main_kernel,
        out_shape=jax.ShapeDtypeStruct((B, S_qp, E), encoder_output.dtype),
        grid_spec=pltpu.PrefetchScalarGridSpec(
            num_scalar_prefetch=0,
            grid=(B // bb,),
            in_specs=[
                pl.BlockSpec((S_qp, E), lambda i: (0, 0)),          # q2 (pre-scaled)
                pl.BlockSpec((S_qp, E), lambda i: (0, 0)),          # ln1
                pl.BlockSpec((bb, S_kv, E), lambda i: (i, 0, 0)),   # encoder_output
                pl.BlockSpec((bb, S_kv, E), lambda i: (i, 0, 0)),   # positional_encoding
                pl.BlockSpec(packed["main_w"].shape, lambda i: (0, 0)),
                pl.BlockSpec(packed["main_b"].shape, lambda i: (0, 0)),
                pl.BlockSpec(packed["w1p"].shape, lambda i: (0, 0)),
                pl.BlockSpec(packed["b1p"].shape, lambda i: (0, 0)),
                pl.BlockSpec(packed["w2p"].shape, lambda i: (0, 0)),
            ],
            out_specs=pl.BlockSpec((bb, S_qp, E), lambda i: (i, 0, 0)),
        ),
        compiler_params=pltpu.CompilerParams(dimension_semantics=("parallel",)),
    )(q2p, ln1p, encoder_output, positional_encoding,
      packed["main_w"], packed["main_b"], packed["w1p"], packed["b1p"], packed["w2p"])

    return out[:, :S_q, :]


# ------------------------------ plain-JAX reference ------------------------------
def decoder_layer_ref(encoder_output, positional_encoding, object_queries, params,
                      compute_dtype=jnp.bfloat16):
    f32 = jnp.float32
    folded = fold_params(params, compute_dtype)
    cdt = folded["wq1"].dtype
    oq = object_queries[0].astype(f32)
    g, b = folded["gamma"], folded["beta"]

    def mm(x, w, bias):
        return jnp.dot(x.astype(cdt), w, preferred_element_type=f32) + bias

    # Batch-invariant part (scale / doubling already folded into the weights).
    q1 = mm(oq, folded["wq1"], folded["bq1"])
    k1 = mm(oq, folded["wk1"], folded["bk1"])
    v1 = mm(oq, folded["wv1"], folded["bv1"])
    s1 = jnp.dot(q1.astype(cdt), k1.astype(cdt).T, preferred_element_type=f32)
    p1 = jax.nn.softmax(s1, axis=-1)
    mha1 = mm(jnp.dot(p1.astype(cdt), v1.astype(cdt), preferred_element_type=f32),
              folded["wo1"], folded["bo1"])
    ln1 = _layer_norm(mha1, g, b) + oq
    q2 = mm(ln1 + oq, folded["wq2"], folded["bq2"])

    def one(enc, pos):
        k2 = mm(pos + enc, folded["wk2"], folded["bk2"])
        v2 = mm(enc, folded["wv2"], folded["bv2"])
        s2 = jnp.dot(q2.astype(cdt), k2.astype(cdt).T, preferred_element_type=f32)
        p2 = jax.nn.softmax(s2, axis=-1)
        mha2 = mm(jnp.dot(p2.astype(cdt), v2.astype(cdt), preferred_element_type=f32),
                  folded["wo2"], folded["bo2"])
        ln2 = _layer_norm(mha2, g, b) + ln1
        h = _gelu_exact(mm(ln2, folded["w1"], folded["b1"]))
        mlp1 = mm(h, folded["w2"], folded["b2"])
        return _layer_norm(mlp1, g, b) + ln2

    return jax.vmap(one)(encoder_output, positional_encoding)


# ------------------------------ deterministic params ------------------------------
def init_params(key, E, M):
    names = [
        ("wq1", (E, E)), ("bq1", (1, E)), ("wk1", (E, E)), ("bk1", (1, E)),
        ("wv1", (E, E)), ("bv1", (1, E)), ("wo1", (E, E)), ("bo1", (1, E)),
        ("wq2", (E, E)), ("bq2", (1, E)), ("wk2", (E, E)), ("bk2", (1, E)),
        ("wv2", (E, E)), ("bv2", (1, E)), ("wo2", (E, E)), ("bo2", (1, E)),
        ("w1", (E, M)), ("b1", (1, M)), ("w2", (M, E)), ("b2", (1, E)),
    ]
    keys = jax.random.split(key, len(names) + 2)
    params = {}
    for (name, shape), k in zip(names, keys[:len(names)]):
        params[name] = 0.05 * jax.random.normal(k, shape, jnp.float32)
    params["gamma"] = 1.0 + 0.1 * jax.random.normal(keys[-2], (1, E), jnp.float32)
    params["beta"] = 0.1 * jax.random.normal(keys[-1], (1, E), jnp.float32)
    return params


# ------------------------------------- main ---------------------------------------
if __name__ == "__main__":
    # Small, module-consistent shapes: 10 object queries (fixed by the module),
    # embed_dim scaled down to 128, mlp_size = 64 (as in the module); batch = 8
    # with block_b = 4 to exercise the batch-block grid / parallel axis.
    B, S_Q, S_KV, E, M = 8, 10, 16, 128, 64

    key = jax.random.PRNGKey(0)
    k_enc, k_pos, k_par = jax.random.split(key, 3)

    encoder_output = jax.random.normal(k_enc, (B, S_KV, E), jnp.float32)
    positional_encoding = jax.random.normal(k_pos, (B, S_KV, E), jnp.float32)
    object_queries = jnp.zeros((1, S_Q, E), jnp.float32)  # torch.zeros(BATCH_SIZE, 10, E)
    params = init_params(k_par, E, M)

    run = jax.jit(lambda e, p, q, w: decoder_layer(e, p, q, w, block_b=4))
    out = jax.block_until_ready(run(encoder_output, positional_encoding,
                                    object_queries, params))

    ref = jax.block_until_ready(
        decoder_layer_ref(encoder_output, positional_encoding, object_queries, params))

    assert out.shape == (B, S_Q, E)
    # Tolerance covers bf16 matmul operands + the EUP approximate reciprocal in
    # the softmax; structural bugs produce O(0.1 - 1) errors and would still fail.
    max_err = jnp.max(jnp.abs(out - ref))
    assert jnp.allclose(out, ref, rtol=2e-2, atol=2e-2), f"max abs err = {max_err}"
    print("KERNEL_OK")
</pallas_src>

<mosaic_0001>
module attributes {stable_mosaic.version = 11 : i64} {
  func.func @decoder_precompute_kernel(%arg0: i32, %arg1: memref<10x128xf32, #tpu.memory_space<vmem>>, %arg2: memref<640x128xbf16, #tpu.memory_space<vmem>>, %arg3: memref<7x128xf32, #tpu.memory_space<vmem>>, %arg4: memref<10x128xf32, #tpu.memory_space<vmem>>, %arg5: memref<10x128xf32, #tpu.memory_space<vmem>>) attributes {dimension_semantics = [#tpu.dimension_semantics<arbitrary>], iteration_bounds = array<i64: 1>, scalar_prefetch = 0 : i64, scratch_operands = 0 : i64, tpu.core_type = #tpu.core_type<tc>, window_params = [{pipeline_mode = #tpu.pipeline_mode<synchronous>, transform_indices = @transform_0, window_bounds = array<i64: 10, 128>}, {pipeline_mode = #tpu.pipeline_mode<synchronous>, transform_indices = @transform_1, window_bounds = array<i64: 640, 128>}, {pipeline_mode = #tpu.pipeline_mode<synchronous>, transform_indices = @transform_2, window_bounds = array<i64: 7, 128>}, {pipeline_mode = #tpu.pipeline_mode<synchronous>, transform_indices = @transform_3, window_bounds = array<i64: 10, 128>}, {pipeline_mode = #tpu.pipeline_mode<synchronous>, transform_indices = @transform_4, window_bounds = array<i64: 10, 128>}]} {
    %c0 = arith.constant 0 : index
    %c0_0 = arith.constant 0 : index
    %0 = vector.load %arg1[%c0, %c0_0] : memref<10x128xf32, #tpu.memory_space<vmem>>, vector<10x128xf32>
    %c0_1 = arith.constant 0 : index
    %c0_2 = arith.constant 0 : index
    %1 = vector.load %arg2[%c0_1, %c0_2] : memref<640x128xbf16, #tpu.memory_space<vmem>>, vector<128x128xbf16>
    %c128 = arith.constant 128 : index
    %c0_3 = arith.constant 0 : index
    %2 = vector.load %arg2[%c128, %c0_3] : memref<640x128xbf16, #tpu.memory_space<vmem>>, vector<128x128xbf16>
    %c256 = arith.constant 256 : index
    %c0_4 = arith.constant 0 : index
    %3 = vector.load %arg2[%c256, %c0_4] : memref<640x128xbf16, #tpu.memory_space<vmem>>, vector<128x128xbf16>
    %c384 = arith.constant 384 : index
    %c0_5 = arith.constant 0 : index
    %4 = vector.load %arg2[%c384, %c0_5] : memref<640x128xbf16, #tpu.memory_space<vmem>>, vector<128x128xbf16>
    %c512 = arith.constant 512 : index
    %c0_6 = arith.constant 0 : index
    %5 = vector.load %arg2[%c512, %c0_6] : memref<640x128xbf16, #tpu.memory_space<vmem>>, vector<128x128xbf16>
    %c0_7 = arith.constant 0 : index
    %c0_8 = arith.constant 0 : index
    %6 = vector.load %arg3[%c0_7, %c0_8] : memref<7x128xf32, #tpu.memory_space<vmem>>, vector<1x128xf32>
    %c1 = arith.constant 1 : index
    %c0_9 = arith.constant 0 : index
    %7 = vector.load %arg3[%c1, %c0_9] : memref<7x128xf32, #tpu.memory_space<vmem>>, vector<1x128xf32>
    %c2 = arith.constant 2 : index
    %c0_10 = arith.constant 0 : index
    %8 = vector.load %arg3[%c2, %c0_10] : memref<7x128xf32, #tpu.memory_space<vmem>>, vector<1x128xf32>
    %c3 = arith.constant 3 : index
    %c0_11 = arith.constant 0 : index
    %9 = vector.load %arg3[%c3, %c0_11] : memref<7x128xf32, #tpu.memory_space<vmem>>, vector<1x128xf32>
    %c4 = arith.constant 4 : index
    %c0_12 = arith.constant 0 : index
    %10 = vector.load %arg3[%c4, %c0_12] : memref<7x128xf32, #tpu.memory_space<vmem>>, vector<1x128xf32>
    %c5 = arith.constant 5 : index
    %c0_13 = arith.constant 0 : index
    %11 = vector.load %arg3[%c5, %c0_13] : memref<7x128xf32, #tpu.memory_space<vmem>>, vector<1x128xf32>
    %c6 = arith.constant 6 : index
    %c0_14 = arith.constant 0 : index
    %12 = vector.load %arg3[%c6, %c0_14] : memref<7x128xf32, #tpu.memory_space<vmem>>, vector<1x128xf32>
    %13 = arith.truncf %0 : vector<10x128xf32> to vector<10x128xbf16>
    %cst = arith.constant dense<0.000000e+00> : vector<10x128xf32>
    %14 = tpu.matmul %13, %1, %cst {dimension_numbers = #tpu.dot_dimension_numbers<[1], [0], [0], [1], [0, 0, 1, 1], [], []>} : vector<10x128xbf16>, vector<128x128xbf16>, vector<10x128xf32> -> vector<10x128xf32>
    %15 = vector.broadcast %6 : vector<1x128xf32> to vector<10x128xf32>
    %16 = arith.addf %14, %15 : vector<10x128xf32>
    %cst_15 = arith.constant dense<0.000000e+00> : vector<10x128xf32>
    %17 = tpu.matmul %13, %2, %cst_15 {dimension_numbers = #tpu.dot_dimension_numbers<[1], [0], [0], [1], [0, 0, 1, 1], [], []>} : vector<10x128xbf16>, vector<128x128xbf16>, vector<10x128xf32> -> vector<10x128xf32>
    %18 = vector.broadcast %7 : vector<1x128xf32> to vector<10x128xf32>
    %19 = arith.addf %17, %18 : vector<10x128xf32>
    %cst_16 = arith.constant dense<0.000000e+00> : vector<10x128xf32>
    %20 = tpu.matmul %13, %3, %cst_16 {dimension_numbers = #tpu.dot_dimension_numbers<[1], [0], [0], [1], [0, 0, 1, 1], [], []>} : vector<10x128xbf16>, vector<128x128xbf16>, vector<10x128xf32> -> vector<10x128xf32>
    %21 = vector.broadcast %8 : vector<1x128xf32> to vector<10x128xf32>
    %22 = arith.addf %20, %21 : vector<10x128xf32>
    %23 = arith.truncf %16 : vector<10x128xf32> to vector<10x128xbf16>
    %24 = arith.truncf %19 : vector<10x128xf32> to vector<10x128xbf16>
    %cst_17 = arith.constant dense<0.000000e+00> : vector<10x10xf32>
    %25 = tpu.matmul %23, %24, %cst_17 {dimension_numbers = #tpu.dot_dimension_numbers<[1], [1], [0], [0], [0, 0, 1, 0], [], []>} : vector<10x128xbf16>, vector<10x128xbf16>, vector<10x10xf32> -> vector<10x10xf32>
    %cst_18 = arith.constant dense<0xFF800000> : vector<10xf32>
    %26 = vector.multi_reduction <maximumf>, %25, %cst_18 [1] : vector<10x10xf32> to vector<10xf32>
    %27 = vector.shape_cast %26 : vector<10xf32> to vector<10x1xf32>
    %28 = vector.broadcast %27 : vector<10x1xf32> to vector<10x10xf32>
    %29 = arith.subf %25, %28 : vector<10x10xf32>
    %30 = math.exp %29 : vector<10x10xf32>
    %cst_19 = arith.constant dense<0.000000e+00> : vector<10xf32>
    %31 = vector.multi_reduction <add>, %30, %cst_19 [1] : vector<10x10xf32> to vector<10xf32>
    %32 = vector.shape_cast %31 : vector<10xf32> to vector<10x1xf32>
    %33 = tpu.reciprocal %32 {approx = true} : vector<10x1xf32> -> vector<10x1xf32>
    %34 = vector.broadcast %33 : vector<10x1xf32> to vector<10x10xf32>
    %35 = arith.mulf %30, %34 : vector<10x10xf32>
    %36 = arith.truncf %35 : vector<10x10xf32> to vector<10x10xbf16>
    %37 = arith.truncf %22 : vector<10x128xf32> to vector<10x128xbf16>
    %cst_20 = arith.constant dense<0.000000e+00> : vector<10x128xf32>
    %38 = tpu.matmul %36, %37, %cst_20 {dimension_numbers = #tpu.dot_dimension_numbers<[1], [0], [0], [1], [0, 0, 1, 1], [], []>} : vector<10x10xbf16>, vector<10x128xbf16>, vector<10x128xf32> -> vector<10x128xf32>
    %39 = arith.truncf %38 : vector<10x128xf32> to vector<10x128xbf16>
    %cst_21 = arith.constant dense<0.000000e+00> : vector<10x128xf32>
    %40 = tpu.matmul %39, %4, %cst_21 {dimension_numbers = #tpu.dot_dimension_numbers<[1], [0], [0], [1], [0, 0, 1, 1], [], []>} : vector<10x128xbf16>, vector<128x128xbf16>, vector<10x128xf32> -> vector<10x128xf32>
    %41 = vector.broadcast %9 : vector<1x128xf32> to vector<10x128xf32>
    %42 = arith.addf %40, %41 : vector<10x128xf32>
    %cst_22 = arith.constant dense<0.000000e+00> : vector<10xf32>
    %43 = vector.multi_reduction <add>, %42, %cst_22 [1] : vector<10x128xf32> to vector<10xf32>
    %44 = vector.shape_cast %43 : vector<10xf32> to vector<10x1xf32>
    %cst_23 = arith.constant 1.280000e+02 : f32
    %45 = vector.broadcast %cst_23 : f32 to vector<10x1xf32>
    %46 = arith.divf %44, %45 : vector<10x1xf32>
    %47 = vector.broadcast %46 : vector<10x1xf32> to vector<10x128xf32>
    %48 = arith.subf %42, %47 : vector<10x128xf32>
    %49 = arith.mulf %48, %48 : vector<10x128xf32>
    %cst_24 = arith.constant dense<0.000000e+00> : vector<10xf32>
    %50 = vector.multi_reduction <add>, %49, %cst_24 [1] : vector<10x128xf32> to vector<10xf32>
    %51 = vector.shape_cast %50 : vector<10xf32> to vector<10x1xf32>
    %cst_25 = arith.constant 1.280000e+02 : f32
    %52 = vector.broadcast %cst_25 : f32 to vector<10x1xf32>
    %53 = arith.divf %51, %52 : vector<10x1xf32>
    %54 = vector.broadcast %46 : vector<10x1xf32> to vector<10x128xf32>
    %55 = arith.subf %42, %54 : vector<10x128xf32>
    %cst_26 = arith.constant 9.99999974E-6 : f32
    %56 = vector.broadcast %cst_26 : f32 to vector<10x1xf32>
    %57 = arith.addf %53, %56 : vector<10x1xf32>
    %58 = math.rsqrt %57 : vector<10x1xf32>
    %59 = vector.broadcast %58 : vector<10x1xf32> to vector<10x128xf32>
    %60 = arith.mulf %55, %59 : vector<10x128xf32>
    %61 = vector.broadcast %11 : vector<1x128xf32> to vector<10x128xf32>
    %62 = arith.mulf %60, %61 : vector<10x128xf32>
    %63 = vector.broadcast %12 : vector<1x128xf32> to vector<10x128xf32>
    %64 = arith.addf %62, %63 : vector<10x128xf32>
    %65 = arith.addf %64, %0 : vector<10x128xf32>
    %66 = arith.addf %65, %0 : vector<10x128xf32>
    %67 = arith.truncf %66 : vector<10x128xf32> to vector<10x128xbf16>
    %cst_27 = arith.constant dense<0.000000e+00> : vector<10x128xf32>
    %68 = tpu.matmul %67, %5, %cst_27 {dimension_numbers = #tpu.dot_dimension_numbers<[1], [0], [0], [1], [0, 0, 1, 1], [], []>} : vector<10x128xbf16>, vector<128x128xbf16>, vector<10x128xf32> -> vector<10x128xf32>
    %69 = vector.broadcast %10 : vector<1x128xf32> to vector<10x128xf32>
    %70 = arith.addf %68, %69 : vector<10x128xf32>
    %c0_28 = arith.constant 0 : index
    %c0_29 = arith.constant 0 : index
    %71 = vector.load %arg4[%c0_28, %c0_29] : memref<10x128xf32, #tpu.memory_space<vmem>>, vector<10x128xf32>
    tpu.vector_store %arg4[%c0_28, %c0_29], %65 {strides = array<i32>} : memref<10x128xf32, #tpu.memory_space<vmem>>, vector<10x128xf32>,
    %c0_30 = arith.constant 0 : index
    %c0_31 = arith.constant 0 : index
    %72 = vector.load %arg5[%c0_30, %c0_31] : memref<10x128xf32, #tpu.memory_space<vmem>>, vector<10x128xf32>
    tpu.vector_store %arg5[%c0_30, %c0_31], %70 {strides = array<i32>} : memref<10x128xf32, #tpu.memory_space<vmem>>, vector<10x128xf32>,
    return
  }
  func.func @transform_0(%arg0: i32) -> (i32, i32) {
    %c0_i32 = arith.constant 0 : i32
    %c0_i32_0 = arith.constant 0 : i32
    %c0_i32_1 = arith.constant 0 : i32
    return %c0_i32, %c0_i32_0 : i32, i32
  }
  func.func @transform_1(%arg0: i32) -> (i32, i32) {
    %c0_i32 = arith.constant 0 : i32
    %c0_i32_0 = arith.constant 0 : i32
    %c0_i32_1 = arith.constant 0 : i32
    return %c0_i32, %c0_i32_0 : i32, i32
  }
  func.func @transform_2(%arg0: i32) -> (i32, i32) {
    %c0_i32 = arith.constant 0 : i32
    %c0_i32_0 = arith.constant 0 : i32
    %c0_i32_1 = arith.constant 0 : i32
    return %c0_i32, %c0_i32_0 : i32, i32
  }
  func.func @transform_3(%arg0: i32) -> (i32, i32) {
    %c0_i32 = arith.constant 0 : i32
    %c0_i32_0 = arith.constant 0 : i32
    %c0_i32_1 = arith.constant 0 : i32
    return %c0_i32, %c0_i32_0 : i32, i32
  }
  func.func @transform_4(%arg0: i32) -> (i32, i32) {
    %c0_i32 = arith.constant 0 : i32
    %c0_i32_0 = arith.constant 0 : i32
    %c0_i32_1 = arith.constant 0 : i32
    return %c0_i32, %c0_i32_0 : i32, i32
  }
}

module attributes {stable_mosaic.version = 11 : i64} {
  func.func @decoder_main_kernel(%arg0: i32, %arg1: memref<16x128xf32, #tpu.memory_space<vmem>>, %arg2: memref<16x128xf32, #tpu.memory_space<vmem>>, %arg3: memref<4x16x128xf32, #tpu.memory_space<vmem>>, %arg4: memref<4x16x128xf32, #tpu.memory_space<vmem>>, %arg5: memref<384x128xbf16, #tpu.memory_space<vmem>>, %arg6: memref<6x128xf32, #tpu.memory_space<vmem>>, %arg7: memref<128x128xbf16, #tpu.memory_space<vmem>>, %arg8: memref<1x128xf32, #tpu.memory_space<vmem>>, %arg9: memref<128x128xbf16, #tpu.memory_space<vmem>>, %arg10: memref<4x16x128xf32, #tpu.memory_space<vmem>>) attributes {dimension_semantics = [#tpu.dimension_semantics<parallel>], iteration_bounds = array<i64: 2>, scalar_prefetch = 0 : i64, scratch_operands = 0 : i64, tpu.core_type = #tpu.core_type<tc>, window_params = [{pipeline_mode = #tpu.pipeline_mode<synchronous>, transform_indices = @transform_0, window_bounds = array<i64: 16, 128>}, {pipeline_mode = #tpu.pipeline_mode<synchronous>, transform_indices = @transform_1, window_bounds = array<i64: 16, 128>}, {transform_indices = @transform_2, window_bounds = array<i64: 4, 16, 128>}, {transform_indices = @transform_3, window_bounds = array<i64: 4, 16, 128>}, {pipeline_mode = #tpu.pipeline_mode<synchronous>, transform_indices = @transform_4, window_bounds = array<i64: 384, 128>}, {pipeline_mode = #tpu.pipeline_mode<synchronous>, transform_indices = @transform_5, window_bounds = array<i64: 6, 128>}, {pipeline_mode = #tpu.pipeline_mode<synchronous>, transform_indices = @transform_6, window_bounds = array<i64: 128, 128>}, {pipeline_mode = #tpu.pipeline_mode<synchronous>, transform_indices = @transform_7, window_bounds = array<i64: 1, 128>}, {pipeline_mode = #tpu.pipeline_mode<synchronous>, transform_indices = @transform_8, window_bounds = array<i64: 128, 128>}, {transform_indices = @transform_9, window_bounds = array<i64: 4, 16, 128>}]} {
    %c0 = arith.constant 0 : index
    %c0_0 = arith.constant 0 : index
    %0 = vector.load %arg5[%c0, %c0_0] : memref<384x128xbf16, #tpu.memory_space<vmem>>, vector<128x128xbf16>
    %c128 = arith.constant 128 : index
    %c0_1 = arith.constant 0 : index
    %1 = vector.load %arg5[%c128, %c0_1] : memref<384x128xbf16, #tpu.memory_space<vmem>>, vector<128x128xbf16>
    %c256 = arith.constant 256 : index
    %c0_2 = arith.constant 0 : index
    %2 = vector.load %arg5[%c256, %c0_2] : memref<384x128xbf16, #tpu.memory_space<vmem>>, vector<128x128xbf16>
    %c0_3 = arith.constant 0 : index
    %c0_4 = arith.constant 0 : index
    %3 = vector.load %arg6[%c0_3, %c0_4] : memref<6x128xf32, #tpu.memory_space<vmem>>, vector<1x128xf32>
    %c1 = arith.constant 1 : index
    %c0_5 = arith.constant 0 : index
    %4 = vector.load %arg6[%c1, %c0_5] : memref<6x128xf32, #tpu.memory_space<vmem>>, vector<1x128xf32>
    %c2 = arith.constant 2 : index
    %c0_6 = arith.constant 0 : index
    %5 = vector.load %arg6[%c2, %c0_6] : memref<6x128xf32, #tpu.memory_space<vmem>>, vector<1x128xf32>
    %c3 = arith.constant 3 : index
    %c0_7 = arith.constant 0 : index
    %6 = vector.load %arg6[%c3, %c0_7] : memref<6x128xf32, #tpu.memory_space<vmem>>, vector<1x128xf32>
    %c4 = arith.constant 4 : index
    %c0_8 = arith.constant 0 : index
    %7 = vector.load %arg6[%c4, %c0_8] : memref<6x128xf32, #tpu.memory_space<vmem>>, vector<1x128xf32>
    %c5 = arith.constant 5 : index
    %c0_9 = arith.constant 0 : index
    %8 = vector.load %arg6[%c5, %c0_9] : memref<6x128xf32, #tpu.memory_space<vmem>>, vector<1x128xf32>
    %c0_10 = arith.constant 0 : index
    %c0_11 = arith.constant 0 : index
    %c0_12 = arith.constant 0 : index
    %9 = vector.load %arg3[%c0_10, %c0_11, %c0_12] : memref<4x16x128xf32, #tpu.memory_space<vmem>>, vector<4x16x128xf32>
    %c0_13 = arith.constant 0 : index
    %c0_14 = arith.constant 0 : index
    %c0_15 = arith.constant 0 : index
    %10 = vector.load %arg4[%c0_13, %c0_14, %c0_15] : memref<4x16x128xf32, #tpu.memory_space<vmem>>, vector<4x16x128xf32>
    %11 = arith.addf %10, %9 : vector<4x16x128xf32>
    %12 = vector.shape_cast %11 : vector<4x16x128xf32> to vector<64x128xf32>
    %13 = arith.truncf %12 : vector<64x128xf32> to vector<64x128xbf16>
    %cst = arith.constant dense<0.000000e+00> : vector<64x128xf32>
    %14 = tpu.matmul %13, %0, %cst {dimension_numbers = #tpu.dot_dimension_numbers<[1], [0], [0], [1], [0, 0, 1, 1], [], []>} : vector<64x128xbf16>, vector<128x128xbf16>, vector<64x128xf32> -> vector<64x128xf32>
    %15 = vector.broadcast %3 : vector<1x128xf32> to vector<64x128xf32>
    %16 = arith.addf %14, %15 : vector<64x128xf32>
    %17 = vector.shape_cast %16 : vector<64x128xf32> to vector<4x16x128xf32>
    %18 = vector.shape_cast %9 : vector<4x16x128xf32> to vector<64x128xf32>
    %19 = arith.truncf %18 : vector<64x128xf32> to vector<64x128xbf16>
    %cst_16 = arith.constant dense<0.000000e+00> : vector<64x128xf32>
    %20 = tpu.matmul %19, %1, %cst_16 {dimension_numbers = #tpu.dot_dimension_numbers<[1], [0], [0], [1], [0, 0, 1, 1], [], []>} : vector<64x128xbf16>, vector<128x128xbf16>, vector<64x128xf32> -> vector<64x128xf32>
    %21 = vector.broadcast %4 : vector<1x128xf32> to vector<64x128xf32>
    %22 = arith.addf %20, %21 : vector<64x128xf32>
    %23 = vector.shape_cast %22 : vector<64x128xf32> to vector<4x16x128xf32>
    %c0_17 = arith.constant 0 : index
    %c0_18 = arith.constant 0 : index
    %24 = vector.load %arg1[%c0_17, %c0_18] : memref<16x128xf32, #tpu.memory_space<vmem>>, vector<16x128xf32>
    %25 = arith.truncf %24 : vector<16x128xf32> to vector<16x128xbf16>
    %26 = vector.shape_cast %25 : vector<16x128xbf16> to vector<1x16x128xbf16>
    %27 = vector.broadcast %26 : vector<1x16x128xbf16> to vector<4x16x128xbf16>
    %28 = arith.truncf %17 : vector<4x16x128xf32> to vector<4x16x128xbf16>
    "tpu.trace_start"() <{level = 10 : i32, message = "bqd,bkd->bqk"}> : () -> ()
    %cst_19 = arith.constant dense<0.000000e+00> : vector<4x16x16xf32>
    %29 = tpu.matmul %27, %28, %cst_19 {dimension_numbers = #tpu.dot_dimension_numbers<[2], [2], [1], [1], [0, 0, 0, 1, 1, 1], [0], [0]>} : vector<4x16x128xbf16>, vector<4x16x128xbf16>, vector<4x16x16xf32> -> vector<4x16x16xf32>
    "tpu.trace_stop"() : () -> ()
    %cst_20 = arith.constant dense<0xFF800000> : vector<4x16xf32>
    %30 = vector.multi_reduction <maximumf>, %29, %cst_20 [2] : vector<4x16x16xf32> to vector<4x16xf32>
    %31 = vector.shape_cast %30 : vector<4x16xf32> to vector<4x16x1xf32>
    %32 = vector.broadcast %31 : vector<4x16x1xf32> to vector<4x16x16xf32>
    %33 = arith.subf %29, %32 : vector<4x16x16xf32>
    %34 = math.exp %33 : vector<4x16x16xf32>
    %cst_21 = arith.constant dense<0.000000e+00> : vector<4x16xf32>
    %35 = vector.multi_reduction <add>, %34, %cst_21 [2] : vector<4x16x16xf32> to vector<4x16xf32>
    %36 = vector.shape_cast %35 : vector<4x16xf32> to vector<4x16x1xf32>
    %37 = tpu.reciprocal %36 {approx = true} : vector<4x16x1xf32> -> vector<4x16x1xf32>
    %38 = vector.broadcast %37 : vector<4x16x1xf32> to vector<4x16x16xf32>
    %39 = arith.mulf %34, %38 : vector<4x16x16xf32>
    %40 = arith.truncf %39 : vector<4x16x16xf32> to vector<4x16x16xbf16>
    %41 = arith.truncf %23 : vector<4x16x128xf32> to vector<4x16x128xbf16>
    "tpu.trace_start"() <{level = 10 : i32, message = "bqk,bkd->bqd"}> : () -> ()
    %cst_22 = arith.constant dense<0.000000e+00> : vector<4x16x128xf32>
    %42 = tpu.matmul %40, %41, %cst_22 {dimension_numbers = #tpu.dot_dimension_numbers<[2], [1], [1], [2], [0, 0, 0, 1, 1, 2], [0], [0]>} : vector<4x16x16xbf16>, vector<4x16x128xbf16>, vector<4x16x128xf32> -> vector<4x16x128xf32>
    "tpu.trace_stop"() : () -> ()
    %43 = vector.shape_cast %42 : vector<4x16x128xf32> to vector<64x128xf32>
    %44 = arith.truncf %43 : vector<64x128xf32> to vector<64x128xbf16>
    %cst_23 = arith.constant dense<0.000000e+00> : vector<64x128xf32>
    %45 = tpu.matmul %44, %2, %cst_23 {dimension_numbers = #tpu.dot_dimension_numbers<[1], [0], [0], [1], [0, 0, 1, 1], [], []>} : vector<64x128xbf16>, vector<128x128xbf16>, vector<64x128xf32> -> vector<64x128xf32>
    %46 = vector.broadcast %5 : vector<1x128xf32> to vector<64x128xf32>
    %47 = arith.addf %45, %46 : vector<64x128xf32>
    %48 = vector.shape_cast %47 : vector<64x128xf32> to vector<4x16x128xf32>
    %cst_24 = arith.constant dense<0.000000e+00> : vector<4x16xf32>
    %49 = vector.multi_reduction <add>, %48, %cst_24 [2] : vector<4x16x128xf32> to vector<4x16xf32>
    %50 = vector.shape_cast %49 : vector<4x16xf32> to vector<4x16x1xf32>
    %cst_25 = arith.constant 1.280000e+02 : f32
    %51 = vector.broadcast %cst_25 : f32 to vector<4x16x1xf32>
    %52 = arith.divf %50, %51 : vector<4x16x1xf32>
    %53 = vector.broadcast %52 : vector<4x16x1xf32> to vector<4x16x128xf32>
    %54 = arith.subf %48, %53 : vector<4x16x128xf32>
    %55 = arith.mulf %54, %54 : vector<4x16x128xf32>
    %cst_26 = arith.constant dense<0.000000e+00> : vector<4x16xf32>
    %56 = vector.multi_reduction <add>, %55, %cst_26 [2] : vector<4x16x128xf32> to vector<4x16xf32>
    %57 = vector.shape_cast %56 : vector<4x16xf32> to vector<4x16x1xf32>
    %cst_27 = arith.constant 1.280000e+02 : f32
    %58 = vector.broadcast %cst_27 : f32 to vector<4x16x1xf32>
    %59 = arith.divf %57, %58 : vector<4x16x1xf32>
    %60 = vector.broadcast %52 : vector<4x16x1xf32> to vector<4x16x128xf32>
    %61 = arith.subf %48, %60 : vector<4x16x128xf32>
    %cst_28 = arith.constant 9.99999974E-6 : f32
    %62 = vector.broadcast %cst_28 : f32 to vector<4x16x1xf32>
    %63 = arith.addf %59, %62 : vector<4x16x1xf32>
    %64 = math.rsqrt %63 : vector<4x16x1xf32>
    %65 = vector.broadcast %64 : vector<4x16x1xf32> to vector<4x16x128xf32>
    %66 = arith.mulf %61, %65 : vector<4x16x128xf32>
    %67 = vector.shape_cast %7 : vector<1x128xf32> to vector<1x1x128xf32>
    %68 = vector.broadcast %67 : vector<1x1x128xf32> to vector<4x16x128xf32>
    %69 = arith.mulf %66, %68 : vector<4x16x128xf32>
    %70 = vector.shape_cast %8 : vector<1x128xf32> to vector<1x1x128xf32>
    %71 = vector.broadcast %70 : vector<1x1x128xf32> to vector<4x16x128xf32>
    %72 = arith.addf %69, %71 : vector<4x16x128xf32>
    %c0_29 = arith.constant 0 : index
    %c0_30 = arith.constant 0 : index
    %73 = vector.load %arg2[%c0_29, %c0_30] : memref<16x128xf32, #tpu.memory_space<vmem>>, vector<16x128xf32>
    %74 = vector.shape_cast %73 : vector<16x128xf32> to vector<1x16x128xf32>
    %75 = vector.broadcast %74 : vector<1x16x128xf32> to vector<4x16x128xf32>
    %76 = arith.addf %72, %75 : vector<4x16x128xf32>
    %c0_31 = arith.constant 0 : index
    %c0_32 = arith.constant 0 : index
    %77 = vector.load %arg7[%c0_31, %c0_32] : memref<128x128xbf16, #tpu.memory_space<vmem>>, vector<128x128xbf16>
    %c0_33 = arith.constant 0 : index
    %c0_34 = arith.constant 0 : index
    %78 = vector.load %arg8[%c0_33, %c0_34] : memref<1x128xf32, #tpu.memory_space<vmem>>, vector<1x128xf32>
    %79 = vector.shape_cast %76 : vector<4x16x128xf32> to vector<64x128xf32>
    %80 = arith.truncf %79 : vector<64x128xf32> to vector<64x128xbf16>
    %cst_35 = arith.constant dense<0.000000e+00> : vector<64x128xf32>
    %81 = tpu.matmul %80, %77, %cst_35 {dimension_numbers = #tpu.dot_dimension_numbers<[1], [0], [0], [1], [0, 0, 1, 1], [], []>} : vector<64x128xbf16>, vector<128x128xbf16>, vector<64x128xf32> -> vector<64x128xf32>
    %82 = vector.broadcast %78 : vector<1x128xf32> to vector<64x128xf32>
    %83 = arith.addf %81, %82 : vector<64x128xf32>
    %84 = vector.shape_cast %83 : vector<64x128xf32> to vector<4x16x128xf32>
    %cst_36 = arith.constant 5.000000e-01 : f32
    %85 = vector.broadcast %cst_36 : f32 to vector<4x16x128xf32>
    %86 = arith.mulf %85, %84 : vector<4x16x128xf32>
    %cst_37 = arith.constant 2.000000e+00 : f32
    %87 = math.sqrt %cst_37 : f32
    %cst_38 = arith.constant 1.000000e+00 : f32
    %88 = arith.divf %cst_38, %87 : f32
    %89 = vector.broadcast %88 : f32 to vector<4x16x128xf32>
    %90 = arith.mulf %84, %89 : vector<4x16x128xf32>
    %91 = math.erf %90 : vector<4x16x128xf32>
    %cst_39 = arith.constant 1.000000e+00 : f32
    %92 = vector.broadcast %cst_39 : f32 to vector<4x16x128xf32>
    %93 = arith.addf %92, %91 : vector<4x16x128xf32>
    %94 = arith.mulf %86, %93 : vector<4x16x128xf32>
    %c0_40 = arith.constant 0 : index
    %c0_41 = arith.constant 0 : index
    %95 = vector.load %arg9[%c0_40, %c0_41] : memref<128x128xbf16, #tpu.memory_space<vmem>>, vector<128x128xbf16>
    %96 = vector.shape_cast %94 : vector<4x16x128xf32> to vector<64x128xf32>
    %97 = arith.truncf %96 : vector<64x128xf32> to vector<64x128xbf16>
    %cst_42 = arith.constant dense<0.000000e+00> : vector<64x128xf32>
    %98 = tpu.matmul %97, %95, %cst_42 {dimension_numbers = #tpu.dot_dimension_numbers<[1], [0], [0], [1], [0, 0, 1, 1], [], []>} : vector<64x128xbf16>, vector<128x128xbf16>, vector<64x128xf32> -> vector<64x128xf32>
    %99 = vector.broadcast %6 : vector<1x128xf32> to vector<64x128xf32>
    %100 = arith.addf %98, %99 : vector<64x128xf32>
    %101 = vector.shape_cast %100 : vector<64x128xf32> to vector<4x16x128xf32>
    %cst_43 = arith.constant dense<0.000000e+00> : vector<4x16xf32>
    %102 = vector.multi_reduction <add>, %101, %cst_43 [2] : vector<4x16x128xf32> to vector<4x16xf32>
    %103 = vector.shape_cast %102 : vector<4x16xf32> to vector<4x16x1xf32>
    %cst_44 = arith.constant 1.280000e+02 : f32
    %104 = vector.broadcast %cst_44 : f32 to vector<4x16x1xf32>
    %105 = arith.divf %103, %104 : vector<4x16x1xf32>
    %106 = vector.broadcast %105 : vector<4x16x1xf32> to vector<4x16x128xf32>
    %107 = arith.subf %101, %106 : vector<4x16x128xf32>
    %108 = arith.mulf %107, %107 : vector<4x16x128xf32>
    %cst_45 = arith.constant dense<0.000000e+00> : vector<4x16xf32>
    %109 = vector.multi_reduction <add>, %108, %cst_45 [2] : vector<4x16x128xf32> to vector<4x16xf32>
    %110 = vector.shape_cast %109 : vector<4x16xf32> to vector<4x16x1xf32>
    %cst_46 = arith.constant 1.280000e+02 : f32
    %111 = vector.broadcast %cst_46 : f32 to vector<4x16x1xf32>
    %112 = arith.divf %110, %111 : vector<4x16x1xf32>
    %113 = vector.broadcast %105 : vector<4x16x1xf32> to vector<4x16x128xf32>
    %114 = arith.subf %101, %113 : vector<4x16x128xf32>
    %cst_47 = arith.constant 9.99999974E-6 : f32
    %115 = vector.broadcast %cst_47 : f32 to vector<4x16x1xf32>
    %116 = arith.addf %112, %115 : vector<4x16x1xf32>
    %117 = math.rsqrt %116 : vector<4x16x1xf32>
    %118 = vector.broadcast %117 : vector<4x16x1xf32> to vector<4x16x128xf32>
    %119 = arith.mulf %114, %118 : vector<4x16x128xf32>
    %120 = vector.shape_cast %7 : vector<1x128xf32> to vector<1x1x128xf32>
    %121 = vector.broadcast %120 : vector<1x1x128xf32> to vector<4x16x128xf32>
    %122 = arith.mulf %119, %121 : vector<4x16x128xf32>
    %123 = vector.shape_cast %8 : vector<1x128xf32> to vector<1x1x128xf32>
    %124 = vector.broadcast %123 : vector<1x1x128xf32> to vector<4x16x128xf32>
    %125 = arith.addf %122, %124 : vector<4x16x128xf32>
    %126 = arith.addf %125, %76 : vector<4x16x128xf32>
    %c0_48 = arith.constant 0 : index
    %c0_49 = arith.constant 0 : index
    %c0_50 = arith.constant 0 : index
    %127 = vector.load %arg10[%c0_48, %c0_49, %c0_50] : memref<4x16x128xf32, #tpu.memory_space<vmem>>, vector<4x16x128xf32>
    tpu.vector_store %arg10[%c0_48, %c0_49, %c0_50], %126 {strides = array<i32>} : memref<4x16x128xf32, #tpu.memory_space<vmem>>, vector<4x16x128xf32>,
    return
  }
  func.func @transform_0(%arg0: i32) -> (i32, i32) {
    %c0_i32 = arith.constant 0 : i32
    %c0_i32_0 = arith.constant 0 : i32
    %c0_i32_1 = arith.constant 0 : i32
    return %c0_i32, %c0_i32_0 : i32, i32
  }
  func.func @transform_1(%arg0: i32) -> (i32, i32) {
    %c0_i32 = arith.constant 0 : i32
    %c0_i32_0 = arith.constant 0 : i32
    %c0_i32_1 = arith.constant 0 : i32
    return %c0_i32, %c0_i32_0 : i32, i32
  }
  func.func @transform_2(%arg0: i32) -> (i32, i32, i32) {
    %c0_i32 = arith.constant 0 : i32
    %c0_i32_0 = arith.constant 0 : i32
    %c0_i32_1 = arith.constant 0 : i32
    return %arg0, %c0_i32, %c0_i32_0 : i32, i32, i32
  }
  func.func @transform_3(%arg0: i32) -> (i32, i32, i32) {
    %c0_i32 = arith.constant 0 : i32
    %c0_i32_0 = arith.constant 0 : i32
    %c0_i32_1 = arith.constant 0 : i32
    return %arg0, %c0_i32, %c0_i32_0 : i32, i32, i32
  }
  func.func @transform_4(%arg0: i32) -> (i32, i32) {
    %c0_i32 = arith.constant 0 : i32
    %c0_i32_0 = arith.constant 0 : i32
    %c0_i32_1 = arith.constant 0 : i32
    return %c0_i32, %c0_i32_0 : i32, i32
  }
  func.func @transform_5(%arg0: i32) -> (i32, i32) {
    %c0_i32 = arith.constant 0 : i32
    %c0_i32_0 = arith.constant 0 : i32
    %c0_i32_1 = arith.constant 0 : i32
    return %c0_i32, %c0_i32_0 : i32, i32
  }
  func.func @transform_6(%arg0: i32) -> (i32, i32) {
    %c0_i32 = arith.constant 0 : i32
    %c0_i32_0 = arith.constant 0 : i32
    %c0_i32_1 = arith.constant 0 : i32
    return %c0_i32, %c0_i32_0 : i32, i32
  }
  func.func @transform_7(%arg0: i32) -> (i32, i32) {
    %c0_i32 = arith.constant 0 : i32
    %c0_i32_0 = arith.constant 0 : i32
    %c0_i32_1 = arith.constant 0 : i32
    return %c0_i32, %c0_i32_0 : i32, i32
  }
  func.func @transform_8(%arg0: i32) -> (i32, i32) {
    %c0_i32 = arith.constant 0 : i32
    %c0_i32_0 = arith.constant 0 : i32
    %c0_i32_1 = arith.constant 0 : i32
    return %c0_i32, %c0_i32_0 : i32, i32
  }
  func.func @transform_9(%arg0: i32) -> (i32, i32, i32) {
    %c0_i32 = arith.constant 0 : i32
    %c0_i32_0 = arith.constant 0 : i32
    %c0_i32_1 = arith.constant 0 : i32
    return %arg0, %c0_i32, %c0_i32_0 : i32, i32, i32
  }
}

</mosaic_0001>

<llo_original>
// kernel: _lambda_.2
$region0: #{_lambda_.2}
  #allocation0 [shape = 'u32[]', space=smem, size = 0x4, offset = 0x4, fixed_abs, tag = 'smem constant byte address 0x4 - core index']
  #allocation1 [shape = 'u32[144,128]{1,0:T(1,128)}', space=vmem, size = 0x12000, scoped, tag = 'internal scratch']
  %s0 = inlined_call_operand.vmem [shape: f32[10,128], index: 0, kind: input, shape index: {}]
  %s1 = inlined_call_operand.vmem [shape: bf16[640,128], index: 1, kind: input, shape index: {}]
  %s2 = inlined_call_operand.vmem [shape: f32[7,128], index: 2, kind: input, shape index: {}]
  %s3 = inlined_call_operand.vmem [shape: f32[10,128], index: 3, kind: output, shape index: {0}]
  %s4 = inlined_call_operand.vmem [shape: f32[10,128], index: 4, kind: output, shape index: {1}]
  %5 = xla_tuple %s3, %s4
  %s6 = sld [smem:[#allocation0]]
  $region30: #{_lambda_.2} parent=0
    _
  %s8 = ssub.s32 1, %s6
  %s9 = scalar_select 0, %s8, %s6
  // Predicated region
  $region2: #{_lambda_.2} parent=0 // pred_check
    _
  $region3: #{_lambda_.2} parent=0 // pred_check_branch
    %11 = sbr.rel (0) target = $region5
  $region4: #{_lambda_.2} parent=0 // pred_region
    _
  $region5: #{_lambda_.2} parent=0 // pred_fallthru
    _
  // Predicated region
  $region6: #{_lambda_.2} parent=0 // pred_check
    _
  $region7: #{_lambda_.2} parent=0 // pred_check_branch
    %13 = sbr.rel (0) target = $region9
  $region8: #{_lambda_.2} parent=0 // pred_region
    _
  $region9: #{_lambda_.2} parent=0 // pred_fallthru
    _
  // Predicated region
  $region10: #{_lambda_.2} parent=0 // pred_check
    _
  $region11: #{_lambda_.2} parent=0 // pred_check_branch
    %15 = sbr.rel (0) target = $region13
  $region12: #{_lambda_.2} parent=0 // pred_region
    _
  $region13: #{_lambda_.2} parent=0 // pred_fallthru
    _
  %v17 = vld [vmem:[%s0] sm:$0xff]
  %v18 = vld [vmem:[%s0 + $0x8] sm:$0x3]
  %v19 = vld [vmem:[%s1] sm:$0xf]
  %v20 = vld [vmem:[%s1 + $0x4] sm:$0xf]
  %v21 = vld [vmem:[%s1 + $0x8] sm:$0xf]
  %v22 = vld [vmem:[%s1 + $0xc] sm:$0xf]
  %v23 = vld [vmem:[%s1 + $0x10] sm:$0xf]
  %v24 = vld [vmem:[%s1 + $0x14] sm:$0xf]
  %v25 = vld [vmem:[%s1 + $0x18] sm:$0xf]
  %v26 = vld [vmem:[%s1 + $0x1c] sm:$0xf]
  %v27 = vld [vmem:[%s1 + $0x20] sm:$0xf]
  %v28 = vld [vmem:[%s1 + $0x24] sm:$0xf]
  %v29 = vld [vmem:[%s1 + $0x28] sm:$0xf]
  %v30 = vld [vmem:[%s1 + $0x2c] sm:$0xf]
  %v31 = vld [vmem:[%s1 + $0x30] sm:$0xf]
  %v32 = vld [vmem:[%s1 + $0x34] sm:$0xf]
  %v33 = vld [vmem:[%s1 + $0x38] sm:$0xf]
  %v34 = vld [vmem:[%s1 + $0x3c] sm:$0xf]
  %v35 = vld [vmem:[%s1 + $0x40] sm:$0xf]
  %v36 = vld [vmem:[%s1 + $0x44] sm:$0xf]
  %v37 = vld [vmem:[%s1 + $0x48] sm:$0xf]
  %v38 = vld [vmem:[%s1 + $0x4c] sm:$0xf]
  %v39 = vld [vmem:[%s1 + $0x50] sm:$0xf]
  %v40 = vld [vmem:[%s1 + $0x54] sm:$0xf]
  %v41 = vld [vmem:[%s1 + $0x58] sm:$0xf]
  %v42 = vld [vmem:[%s1 + $0x5c] sm:$0xf]
  %v43 = vld [vmem:[%s1 + $0x60] sm:$0xf]
  %v44 = vld [vmem:[%s1 + $0x64] sm:$0xf]
  %v45 = vld [vmem:[%s1 + $0x68] sm:$0xf]
  %v46 = vld [vmem:[%s1 + $0x6c] sm:$0xf]
  %v47 = vld [vmem:[%s1 + $0x70] sm:$0xf]
  %v48 = vld [vmem:[%s1 + $0x74] sm:$0xf]
  %v49 = vld [vmem:[%s1 + $0x78] sm:$0xf]
  %v50 = vld [vmem:[%s1 + $0x7c] sm:$0xf]
  %v51 = vld [vmem:[%s1 + $0x80] sm:$0xf]
  %v52 = vld [vmem:[%s1 + $0x84] sm:$0xf]
  %v53 = vld [vmem:[%s1 + $0x88] sm:$0xf]
  %v54 = vld [vmem:[%s1 + $0x8c] sm:$0xf]
  %v55 = vld [vmem:[%s1 + $0x90] sm:$0xf]
  %v56 = vld [vmem:[%s1 + $0x94] sm:$0xf]
  %v57 = vld [vmem:[%s1 + $0x98] sm:$0xf]
  %v58 = vld [vmem:[%s1 + $0x9c] sm:$0xf]
  %v59 = vld [vmem:[%s1 + $0xa0] sm:$0xf]
  %v60 = vld [vmem:[%s1 + $0xa4] sm:$0xf]
  %v61 = vld [vmem:[%s1 + $0xa8] sm:$0xf]
  %v62 = vld [vmem:[%s1 + $0xac] sm:$0xf]
  %v63 = vld [vmem:[%s1 + $0xb0] sm:$0xf]
  %v64 = vld [vmem:[%s1 + $0xb4] sm:$0xf]
  %v65 = vld [vmem:[%s1 + $0xb8] sm:$0xf]
  %v66 = vld [vmem:[%s1 + $0xbc] sm:$0xf]
  %v67 = vld [vmem:[%s1 + $0xc0] sm:$0xf]
  %v68 = vld [vmem:[%s1 + $0xc4] sm:$0xf]
  %v69 = vld [vmem:[%s1 + $0xc8] sm:$0xf]
  %v70 = vld [vmem:[%s1 + $0xcc] sm:$0xf]
  %v71 = vld [vmem:[%s1 + $0xd0] sm:$0xf]
  %v72 = vld [vmem:[%s1 + $0xd4] sm:$0xf]
  %v73 = vld [vmem:[%s1 + $0xd8] sm:$0xf]
  %v74 = vld [vmem:[%s1 + $0xdc] sm:$0xf]
  %v75 = vld [vmem:[%s1 + $0xe0] sm:$0xf]
  %v76 = vld [vmem:[%s1 + $0xe4] sm:$0xf]
  %v77 = vld [vmem:[%s1 + $0xe8] sm:$0xf]
  %v78 = vld [vmem:[%s1 + $0xec] sm:$0xf]
  %v79 = vld [vmem:[%s1 + $0xf0] sm:$0xf]
  %v80 = vld [vmem:[%s1 + $0xf4] sm:$0xf]
  %v81 = vld [vmem:[%s1 + $0xf8] sm:$0xf]
  %v82 = vld [vmem:[%s1 + $0xfc] sm:$0xf]
  %v83 = vld [vmem:[%s1 + $0x100] sm:$0xf]
  %v84 = vld [vmem:[%s1 + $0x104] sm:$0xf]
  %v85 = vld [vmem:[%s1 + $0x108] sm:$0xf]
  %v86 = vld [vmem:[%s1 + $0x10c] sm:$0xf]
  %v87 = vld [vmem:[%s1 + $0x110] sm:$0xf]
  %v88 = vld [vmem:[%s1 + $0x114] sm:$0xf]
  %v89 = vld [vmem:[%s1 + $0x118] sm:$0xf]
  %v90 = vld [vmem:[%s1 + $0x11c] sm:$0xf]
  %v91 = vld [vmem:[%s1 + $0x120] sm:$0xf]
  %v92 = vld [vmem:[%s1 + $0x124] sm:$0xf]
  %v93 = vld [vmem:[%s1 + $0x128] sm:$0xf]
  %v94 = vld [vmem:[%s1 + $0x12c] sm:$0xf]
  %v95 = vld [vmem:[%s1 + $0x130] sm:$0xf]
  %v96 = vld [vmem:[%s1 + $0x134] sm:$0xf]
  %v97 = vld [vmem:[%s1 + $0x138] sm:$0xf]
  %v98 = vld [vmem:[%s1 + $0x13c] sm:$0xf]
  %v99 = vld [vmem:[%s2] sm:$0x1]
  %v100 = vld [vmem:[%s2 + $0x1] sm:$0x1]
  %v101 = vld [vmem:[%s2 + $0x2] sm:$0x1]
  %v102 = vld [vmem:[%s2 + $0x3] sm:$0x1]
  %v103 = vld [vmem:[%s2 + $0x4] sm:$0x1]
  %v104 = vld [vmem:[%s2 + $0x5] sm:$0x1]
  %v105 = vld [vmem:[%s2 + $0x6] sm:$0x1]
  %v106 = vpack.c.bf16 %v18, %v17
  %v107 = vlaneseq
  %v108 = vshrl.u32 %v107, 7
  %v109 = vsub.s32 0, %v108
  %v110 = vrot.slane %v99, %v109
  %v127 = vunpack.c.l.b16 %v19
  %v128 = vunpack.c.l.b16 %v20
  %v129 = vunpack.c.l.b16 %v21
  %v130 = vunpack.c.l.b16 %v22
  %v131 = vunpack.c.l.b16 %v23
  %v132 = vunpack.c.l.b16 %v24
  %v133 = vunpack.c.l.b16 %v25
  %v134 = vunpack.c.l.b16 %v26
  %v135 = vunpack.c.l.b16 %v27
  %v136 = vunpack.c.l.b16 %v28
  %v137 = vunpack.c.l.b16 %v29
  %v138 = vunpack.c.l.b16 %v30
  %v139 = vunpack.c.l.b16 %v31
  %v140 = vunpack.c.l.b16 %v32
  %v141 = vunpack.c.l.b16 %v33
  %v142 = vunpack.c.l.b16 %v34
  %v143 = vpack.c.b16 %v128, %v127
  %v144 = vpack.c.b16 %v130, %v129
  %v145 = vpack.c.b16 %v132, %v131
  %v146 = vpack.c.b16 %v134, %v133
  %v147 = vpack.c.b16 %v136, %v135
  %v148 = vpack.c.b16 %v138, %v137
  %v149 = vpack.c.b16 %v140, %v139
  %v150 = vpack.c.b16 %v142, %v141
  %159 = vmatprep.subr.bf16.mxu0 0
  %160 = vmatpush1.bf16.msra.mxu0 %v143
  %161 = vmatprep.subr.bf16.mxu0 0
  %162 = vmatpush1.bf16.msra.mxu0 %v144
  %163 = vmatprep.subr.bf16.mxu0 0
  %164 = vmatpush1.bf16.msra.mxu0 %v145
  %165 = vmatprep.subr.bf16.mxu0 0
  %166 = vmatpush1.bf16.msra.mxu0 %v146
  %167 = vmatprep.subr.bf16.mxu0 0
  %168 = vmatpush1.bf16.msra.mxu0 %v147
  %169 = vmatprep.subr.bf16.mxu0 0
  %170 = vmatpush1.bf16.msra.mxu0 %v148
  %171 = vmatprep.subr.bf16.mxu0 0
  %172 = vmatpush1.bf16.msra.mxu0 %v149
  %173 = vmatprep.subr.bf16.mxu0 0
  %174 = vmatpush1.bf16.msra.mxu0 %v150
  %175 = vmatprep.subr.bf16.mxu0 0
  %176 = vmatpush1.bf16.msra.mxu0 0
  %177 = vmatprep.subr.bf16.mxu0 0
  %178 = vmatpush1.bf16.msra.mxu0 0
  %179 = vmatprep.subr.bf16.mxu0 0
  %180 = vmatpush1.bf16.msra.mxu0 0
  %181 = vmatprep.subr.bf16.mxu0 0
  %182 = vmatpush1.bf16.msra.mxu0 0
  %183 = vmatprep.subr.bf16.mxu0 0
  %184 = vmatpush1.bf16.msra.mxu0 0
  %185 = vmatprep.subr.bf16.mxu0 0
  %186 = vmatpush1.bf16.msra.mxu0 0
  %187 = vmatprep.subr.bf16.mxu0 0
  %188 = vmatpush1.bf16.msra.mxu0 0
  %189 = vmatprep.subr.bf16.mxu0 0
  %190 = vmatpush1.bf16.msra.mxu0 0
  %191 = vmatprep.mubr.bf16.mxu0 0
  %192 = vmatmul.mubr.bf16.gmra.mrb[0].mxu0 %v106
  %v193 = vpop.f32.mrb[0].mxu0
  %v194 = vadd.f32 %v110, %v193
  %v195 = vpop.f32.mrb[0].mxu0
  %v196 = vpop.f32.mrb[0].mxu0
  %v197 = vadd.f32 %v110, %v196
  %v198 = vpop.f32.mrb[0].mxu0
  %199 = vdwg.mxu0
  %v200 = vlaneseq
  %v201 = vshrl.u32 %v200, 7
  %v202 = vsub.s32 0, %v201
  %v203 = vrot.slane %v100, %v202
  %v220 = vunpack.c.l.b16 %v35
  %v221 = vunpack.c.l.b16 %v36
  %v222 = vunpack.c.l.b16 %v37
  %v223 = vunpack.c.l.b16 %v38
  %v224 = vunpack.c.l.b16 %v39
  %v225 = vunpack.c.l.b16 %v40
  %v226 = vunpack.c.l.b16 %v41
  %v227 = vunpack.c.l.b16 %v42
  %v228 = vunpack.c.l.b16 %v43
  %v229 = vunpack.c.l.b16 %v44
  %v230 = vunpack.c.l.b16 %v45
  %v231 = vunpack.c.l.b16 %v46
  %v232 = vunpack.c.l.b16 %v47
  %v233 = vunpack.c.l.b16 %v48
  %v234 = vunpack.c.l.b16 %v49
  %v235 = vunpack.c.l.b16 %v50
  %v236 = vpack.c.b16 %v221, %v220
  %v237 = vpack.c.b16 %v223, %v222
  %v238 = vpack.c.b16 %v225, %v224
  %v239 = vpack.c.b16 %v227, %v226
  %v240 = vpack.c.b16 %v229, %v228
  %v241 = vpack.c.b16 %v231, %v230
  %v242 = vpack.c.b16 %v233, %v232
  %v243 = vpack.c.b16 %v235, %v234
  %252 = vmatprep.subr.bf16.mxu0 0
  %253 = vmatpush1.bf16.msra.mxu0 %v236
  %254 = vmatprep.subr.bf16.mxu0 0
  %255 = vmatpush1.bf16.msra.mxu0 %v237
  %256 = vmatprep.subr.bf16.mxu0 0
  %257 = vmatpush1.bf16.msra.mxu0 %v238
  %258 = vmatprep.subr.bf16.mxu0 0
  %259 = vmatpush1.bf16.msra.mxu0 %v239
  %260 = vmatprep.subr.bf16.mxu0 0
  %261 = vmatpush1.bf16.msra.mxu0 %v240
  %262 = vmatprep.subr.bf16.mxu0 0
  %263 = vmatpush1.bf16.msra.mxu0 %v241
  %264 = vmatprep.subr.bf16.mxu0 0
  %265 = vmatpush1.bf16.msra.mxu0 %v242
  %266 = vmatprep.subr.bf16.mxu0 0
  %267 = vmatpush1.bf16.msra.mxu0 %v243
  %268 = vmatprep.subr.bf16.mxu0 0
  %269 = vmatpush1.bf16.msra.mxu0 0
  %270 = vmatprep.subr.bf16.mxu0 0
  %271 = vmatpush1.bf16.msra.mxu0 0
  %272 = vmatprep.subr.bf16.mxu0 0
  %273 = vmatpush1.bf16.msra.mxu0 0
  %274 = vmatprep.subr.bf16.mxu0 0
  %275 = vmatpush1.bf16.msra.mxu0 0
  %276 = vmatprep.subr.bf16.mxu0 0
  %277 = vmatpush1.bf16.msra.mxu0 0
  %278 = vmatprep.subr.bf16.mxu0 0
  %279 = vmatpush1.bf16.msra.mxu0 0
  %280 = vmatprep.subr.bf16.mxu0 0
  %281 = vmatpush1.bf16.msra.mxu0 0
  %282 = vmatprep.subr.bf16.mxu0 0
  %283 = vmatpush1.bf16.msra.mxu0 0
  %284 = vmatprep.mubr.bf16.mxu0 0
  %285 = vmatmul.mubr.bf16.gmra.mrb[0].mxu0 %v106
  %v286 = vpop.f32.mrb[0].mxu0
  %v287 = vadd.f32 %v203, %v286
  %v288 = vpop.f32.mrb[0].mxu0
  %v289 = vpop.f32.mrb[0].mxu0
  %v290 = vadd.f32 %v203, %v289
  %v291 = vpop.f32.mrb[0].mxu0
  %292 = vdwg.mxu0
  %v293 = vlaneseq
  %v294 = vshrl.u32 %v293, 7
  %v295 = vsub.s32 0, %v294
  %v296 = vrot.slane %v101, %v295
  %v313 = vunpack.c.l.b16 %v51
  %v314 = vunpack.c.l.b16 %v52
  %v315 = vunpack.c.l.b16 %v53
  %v316 = vunpack.c.l.b16 %v54
  %v317 = vunpack.c.l.b16 %v55
  %v318 = vunpack.c.l.b16 %v56
  %v319 = vunpack.c.l.b16 %v57
  %v320 = vunpack.c.l.b16 %v58
  %v321 = vunpack.c.l.b16 %v59
  %v322 = vunpack.c.l.b16 %v60
  %v323 = vunpack.c.l.b16 %v61
  %v324 = vunpack.c.l.b16 %v62
  %v325 = vunpack.c.l.b16 %v63
  %v326 = vunpack.c.l.b16 %v64
  %v327 = vunpack.c.l.b16 %v65
  %v328 = vunpack.c.l.b16 %v66
  %v329 = vpack.c.b16 %v314, %v313
  %v330 = vpack.c.b16 %v316, %v315
  %v331 = vpack.c.b16 %v318, %v317
  %v332 = vpack.c.b16 %v320, %v319
  %v333 = vpack.c.b16 %v322, %v321
  %v334 = vpack.c.b16 %v324, %v323
  %v335 = vpack.c.b16 %v326, %v325
  %v336 = vpack.c.b16 %v328, %v327
  %345 = vmatprep.subr.bf16.mxu0 0
  %346 = vmatpush1.bf16.msra.mxu0 %v329
  %347 = vmatprep.subr.bf16.mxu0 0
  %348 = vmatpush1.bf16.msra.mxu0 %v330
  %349 = vmatprep.subr.bf16.mxu0 0
  %350 = vmatpush1.bf16.msra.mxu0 %v331
  %351 = vmatprep.subr.bf16.mxu0 0
  %352 = vmatpush1.bf16.msra.mxu0 %v332
  %353 = vmatprep.subr.bf16.mxu0 0
  %354 = vmatpush1.bf16.msra.mxu0 %v333
  %355 = vmatprep.subr.bf16.mxu0 0
  %356 = vmatpush1.bf16.msra.mxu0 %v334
  %357 = vmatprep.subr.bf16.mxu0 0
  %358 = vmatpush1.bf16.msra.mxu0 %v335
  %359 = vmatprep.subr.bf16.mxu0 0
  %360 = vmatpush1.bf16.msra.mxu0 %v336
  %361 = vmatprep.subr.bf16.mxu0 0
  %362 = vmatpush1.bf16.msra.mxu0 0
  %363 = vmatprep.subr.bf16.mxu0 0
  %364 = vmatpush1.bf16.msra.mxu0 0
  %365 = vmatprep.subr.bf16.mxu0 0
  %366 = vmatpush1.bf16.msra.mxu0 0
  %367 = vmatprep.subr.bf16.mxu0 0
  %368 = vmatpush1.bf16.msra.mxu0 0
  %369 = vmatprep.subr.bf16.mxu0 0
  %370 = vmatpush1.bf16.msra.mxu0 0
  %371 = vmatprep.subr.bf16.mxu0 0
  %372 = vmatpush1.bf16.msra.mxu0 0
  %373 = vmatprep.subr.bf16.mxu0 0
  %374 = vmatpush1.bf16.msra.mxu0 0
  %375 = vmatprep.subr.bf16.mxu0 0
  %376 = vmatpush1.bf16.msra.mxu0 0
  %377 = vmatprep.mubr.bf16.mxu0 0
  %378 = vmatmul.mubr.bf16.gmra.mrb[0].mxu0 %v106
  %v379 = vpop.f32.mrb[0].mxu0
  %v380 = vadd.f32 %v296, %v379
  %v381 = vpop.f32.mrb[0].mxu0
  %v382 = vpop.f32.mrb[0].mxu0
  %v383 = vadd.f32 %v296, %v382
  %v384 = vpop.f32.mrb[0].mxu0
  %385 = vdwg.mxu0
  %v386 = vpack.c.bf16 %v197, %v194
  %v387 = vpack.c.bf16 %v290, %v287
  %388 = vmatprep.subr.bf16.mxu0 0
  %389 = vmatpush1.bf16.xpose.msra.mxu0 %v387
  %390 = vmatprep.subr.bf16.mxu0 0
  %391 = vmatpush1.bf16.xpose.msra.mxu0 0
  %392 = vmatprep.subr.bf16.mxu0 0
  %393 = vmatpush1.bf16.xpose.msra.mxu0 0
  %394 = vmatprep.subr.bf16.mxu0 0
  %395 = vmatpush1.bf16.xpose.msra.mxu0 0
  %396 = vmatprep.subr.bf16.mxu0 0
  %397 = vmatpush1.bf16.xpose.msra.mxu0 0
  %398 = vmatprep.subr.bf16.mxu0 0
  %399 = vmatpush1.bf16.xpose.msra.mxu0 0
  %400 = vmatprep.subr.bf16.mxu0 0
  %401 = vmatpush1.bf16.xpose.msra.mxu0 0
  %402 = vmatprep.subr.bf16.mxu0 0
  %403 = vmatpush1.bf16.xpose.msra.mxu0 0
  %404 = vmatprep.subr.bf16.mxu0 0
  %405 = vmatpush1.bf16.xpose.msra.mxu0 0
  %406 = vmatprep.subr.bf16.mxu0 0
  %407 = vmatpush1.bf16.xpose.msra.mxu0 0
  %408 = vmatprep.subr.bf16.mxu0 0
  %409 = vmatpush1.bf16.xpose.msra.mxu0 0
  %410 = vmatprep.subr.bf16.mxu0 0
  %411 = vmatpush1.bf16.xpose.msra.mxu0 0
  %412 = vmatprep.subr.bf16.mxu0 0
  %413 = vmatpush1.bf16.xpose.msra.mxu0 0
  %414 = vmatprep.subr.bf16.mxu0 0
  %415 = vmatpush1.bf16.xpose.msra.mxu0 0
  %416 = vmatprep.subr.bf16.mxu0 0
  %417 = vmatpush1.bf16.xpose.msra.mxu0 0
  %418 = vmatprep.subr.bf16.mxu0 0
  %419 = vmatpush1.bf16.xpose.msra.mxu0 0
  %420 = vmatprep.mubr.bf16.mxu0 0
  %421 = vmatmul.mubr.bf16.gmra.mrb[0].mxu0 %v386
  %v422 = vpop.f32.mrb[0].mxu0
  %v423 = vadd.f32 0.0, %v422
  %v424 = vpop.f32.mrb[0].mxu0
  %v425 = vpop.f32.mrb[0].mxu0
  %v426 = vadd.f32 0.0, %v425
  %v427 = vpop.f32.mrb[0].mxu0
  %428 = vdwg.mxu0
  %vm429 = vcmask 80896
  %v430 = vsel %vm429, %v423, -inf
  %431 = vmax.xlane.f32.xlu0 %v430
  %v432 = vpop.xlane.xlu0 %431
  %vm433 = vcmask 74752
  %v434 = vsel %vm433, %v426, -inf
  %435 = vmax.xlane.f32.xlu0 %v434
  %v436 = vpop.xlane.xlu0 %435
  %v437 = vsub.f32 %v423, %v432
  %v438 = vsub.f32 %v426, %v436
  %v439 = vmul.f32 %v437, 1.442695
  %v440 = vpow.pop %v439
  %v441 = vmul.f32 %v438, 1.442695
  %v442 = vpow.pop %v441
  %v443 = vsel %vm429, %v440, 0.0
  %444 = vadd.xlane.f32.xlu0 %v443
  %v445 = vpop.xlane.xlu0 %444
  %v446 = vsel %vm433, %v442, 0.0
  %447 = vadd.xlane.f32.xlu0 %v446
  %v448 = vpop.xlane.xlu0 %447
  %v449 = vrcp.pop %v445
  %v450 = vrcp.pop %v448
  %v451 = vmul.f32 %v440, %v449
  %v452 = vmul.f32 %v442, %v450
  %v453 = vpack.c.bf16 %v452, %v451
  %v454 = vpack.c.bf16 %v383, %v380
  %v456 = vsel %vm429, %v453, 0
  %vm458 = vcmask 1044480
  %v460 = vsel %vm458, %v454, 0
  %462 = vmatprep.subr.bf16.mxu0 0
  %463 = vmatpush1.bf16.msra.mxu0 %v460
  %464 = vmatprep.subr.bf16.mxu0 0
  %465 = vmatpush1.bf16.msra.mxu0 0
  %466 = vmatprep.subr.bf16.mxu0 0
  %467 = vmatpush1.bf16.msra.mxu0 0
  %468 = vmatprep.subr.bf16.mxu0 0
  %469 = vmatpush1.bf16.msra.mxu0 0
  %470 = vmatprep.subr.bf16.mxu0 0
  %471 = vmatpush1.bf16.msra.mxu0 0
  %472 = vmatprep.subr.bf16.mxu0 0
  %473 = vmatpush1.bf16.msra.mxu0 0
  %474 = vmatprep.subr.bf16.mxu0 0
  %475 = vmatpush1.bf16.msra.mxu0 0
  %476 = vmatprep.subr.bf16.mxu0 0
  %477 = vmatpush1.bf16.msra.mxu0 0
  %478 = vmatprep.subr.bf16.mxu0 0
  %479 = vmatpush1.bf16.msra.mxu0 0
  %480 = vmatprep.subr.bf16.mxu0 0
  %481 = vmatpush1.bf16.msra.mxu0 0
  %482 = vmatprep.subr.bf16.mxu0 0
  %483 = vmatpush1.bf16.msra.mxu0 0
  %484 = vmatprep.subr.bf16.mxu0 0
  %485 = vmatpush1.bf16.msra.mxu0 0
  %486 = vmatprep.subr.bf16.mxu0 0
  %487 = vmatpush1.bf16.msra.mxu0 0
  %488 = vmatprep.subr.bf16.mxu0 0
  %489 = vmatpush1.bf16.msra.mxu0 0
  %490 = vmatprep.subr.bf16.mxu0 0
  %491 = vmatpush1.bf16.msra.mxu0 0
  %492 = vmatprep.subr.bf16.mxu0 0
  %493 = vmatpush1.bf16.msra.mxu0 0
  %494 = vmatprep.mubr.bf16.mxu0 0
  %495 = vmatmul.mubr.bf16.gmra.mrb[0].mxu0 %v456
  %v496 = vpop.f32.mrb[0].mxu0
  %v497 = vadd.f32 0.0, %v496
  %v498 = vpop.f32.mrb[0].mxu0
  %v499 = vpop.f32.mrb[0].mxu0
  %v500 = vadd.f32 0.0, %v499
  %v501 = vpop.f32.mrb[0].mxu0
  %502 = vdwg.mxu0
  %v503 = vpack.c.bf16 %v500, %v497
  %v504 = vlaneseq
  %v505 = vshrl.u32 %v504, 7
  %v506 = vsub.s32 0, %v505
  %v507 = vrot.slane %v102, %v506
  %v524 = vunpack.c.l.b16 %v67
  %v525 = vunpack.c.l.b16 %v68
  %v526 = vunpack.c.l.b16 %v69
  %v527 = vunpack.c.l.b16 %v70
  %v528 = vunpack.c.l.b16 %v71
  %v529 = vunpack.c.l.b16 %v72
  %v530 = vunpack.c.l.b16 %v73
  %v531 = vunpack.c.l.b16 %v74
  %v532 = vunpack.c.l.b16 %v75
  %v533 = vunpack.c.l.b16 %v76
  %v534 = vunpack.c.l.b16 %v77
  %v535 = vunpack.c.l.b16 %v78
  %v536 = vunpack.c.l.b16 %v79
  %v537 = vunpack.c.l.b16 %v80
  %v538 = vunpack.c.l.b16 %v81
  %v539 = vunpack.c.l.b16 %v82
  %v540 = vpack.c.b16 %v525, %v524
  %v541 = vpack.c.b16 %v527, %v526
  %v542 = vpack.c.b16 %v529, %v528
  %v543 = vpack.c.b16 %v531, %v530
  %v544 = vpack.c.b16 %v533, %v532
  %v545 = vpack.c.b16 %v535, %v534
  %v546 = vpack.c.b16 %v537, %v536
  %v547 = vpack.c.b16 %v539, %v538
  %556 = vmatprep.subr.bf16.mxu0 0
  %557 = vmatpush1.bf16.msra.mxu0 %v540
  %558 = vmatprep.subr.bf16.mxu0 0
  %559 = vmatpush1.bf16.msra.mxu0 %v541
  %560 = vmatprep.subr.bf16.mxu0 0
  %561 = vmatpush1.bf16.msra.mxu0 %v542
  %562 = vmatprep.subr.bf16.mxu0 0
  %563 = vmatpush1.bf16.msra.mxu0 %v543
  %564 = vmatprep.subr.bf16.mxu0 0
  %565 = vmatpush1.bf16.msra.mxu0 %v544
  %566 = vmatprep.subr.bf16.mxu0 0
  %567 = vmatpush1.bf16.msra.mxu0 %v545
  %568 = vmatprep.subr.bf16.mxu0 0
  %569 = vmatpush1.bf16.msra.mxu0 %v546
  %570 = vmatprep.subr.bf16.mxu0 0
  %571 = vmatpush1.bf16.msra.mxu0 %v547
  %572 = vmatprep.subr.bf16.mxu0 0
  %573 = vmatpush1.bf16.msra.mxu0 0
  %574 = vmatprep.subr.bf16.mxu0 0
  %575 = vmatpush1.bf16.msra.mxu0 0
  %576 = vmatprep.subr.bf16.mxu0 0
  %577 = vmatpush1.bf16.msra.mxu0 0
  %578 = vmatprep.subr.bf16.mxu0 0
  %579 = vmatpush1.bf16.msra.mxu0 0
  %580 = vmatprep.subr.bf16.mxu0 0
  %581 = vmatpush1.bf16.msra.mxu0 0
  %582 = vmatprep.subr.bf16.mxu0 0
  %583 = vmatpush1.bf16.msra.mxu0 0
  %584 = vmatprep.subr.bf16.mxu0 0
  %585 = vmatpush1.bf16.msra.mxu0 0
  %586 = vmatprep.subr.bf16.mxu0 0
  %587 = vmatpush1.bf16.msra.mxu0 0
  %588 = vmatprep.mubr.bf16.mxu0 0
  %589 = vmatmul.mubr.bf16.gmra.mrb[0].mxu0 %v503
  %v590 = vpop.f32.mrb[0].mxu0
  %v591 = vadd.f32 %v507, %v590
  %v592 = vpop.f32.mrb[0].mxu0
  %v593 = vpop.f32.mrb[0].mxu0
  %v594 = vadd.f32 %v507, %v593
  %v595 = vpop.f32.mrb[0].mxu0
  %596 = vdwg.mxu0
  %597 = vadd.xlane.f32.xlu0 %v591
  %v598 = vpop.xlane.xlu0 %597
  %vm599 = vcmask 1041408
  %v600 = vsel %vm599, %v594, 0.0
  %601 = vadd.xlane.f32.xlu0 %v600
  %v602 = vpop.xlane.xlu0 %601
  %v603 = vrcp.pop 128.0
  %v604 = vmul.f32 %v598, %v603
  %v605 = vmul.f32 %v602, %v603
  %v606 = vsub.f32 %v591, %v604
  %v607 = vsub.f32 %v594, %v605
  %v608 = vmul.f32 %v606, %v606
  %v609 = vmul.f32 %v607, %v607
  %610 = vadd.xlane.f32.xlu0 %v608
  %v611 = vpop.xlane.xlu0 %610
  %v612 = vsel %vm599, %v609, 0.0
  %613 = vadd.xlane.f32.xlu0 %v612
  %v614 = vpop.xlane.xlu0 %613
  %v615 = vmul.f32 %v611, %v603
  %v616 = vmul.f32 %v614, %v603
  %v617 = vadd.f32 %v615, 1e-05
  %v618 = vadd.f32 %v616, 1e-05
  %v619 = vrsqrt.pop %v617
  %v620 = vrsqrt.pop %v618
  %v621 = vmul.f32 %v606, %v619
  %v622 = vmul.f32 %v607, %v620
  %v623 = vlaneseq
  %v624 = vshrl.u32 %v623, 7
  %v625 = vsub.s32 0, %v624
  %v626 = vrot.slane %v104, %v625
  %v627 = vmul.f32 %v621, %v626
  %v628 = vmul.f32 %v622, %v626
  %v629 = vlaneseq
  %v630 = vshrl.u32 %v629, 7
  %v631 = vsub.s32 0, %v630
  %v632 = vrot.slane %v105, %v631
  %v633 = vadd.f32 %v627, %v632
  %v634 = vadd.f32 %v628, %v632
  %v635 = vadd.f32 %v633, %v17
  %v636 = vadd.f32 %v634, %v18
  %v637 = vadd.f32 %v635, %v17
  %v638 = vadd.f32 %v636, %v18
  %v639 = vpack.c.bf16 %v638, %v637
  %v640 = vlaneseq
  %v641 = vshrl.u32 %v640, 7
  %v642 = vsub.s32 0, %v641
  %v643 = vrot.slane %v103, %v642
  %v660 = vunpack.c.l.b16 %v83
  %v661 = vunpack.c.l.b16 %v84
  %v662 = vunpack.c.l.b16 %v85
  %v663 = vunpack.c.l.b16 %v86
  %v664 = vunpack.c.l.b16 %v87
  %v665 = vunpack.c.l.b16 %v88
  %v666 = vunpack.c.l.b16 %v89
  %v667 = vunpack.c.l.b16 %v90
  %v668 = vunpack.c.l.b16 %v91
  %v669 = vunpack.c.l.b16 %v92
  %v670 = vunpack.c.l.b16 %v93
  %v671 = vunpack.c.l.b16 %v94
  %v672 = vunpack.c.l.b16 %v95
  %v673 = vunpack.c.l.b16 %v96
  %v674 = vunpack.c.l.b16 %v97
  %v675 = vunpack.c.l.b16 %v98
  %v676 = vpack.c.b16 %v661, %v660
  %v677 = vpack.c.b16 %v663, %v662
  %v678 = vpack.c.b16 %v665, %v664
  %v679 = vpack.c.b16 %v667, %v666
  %v680 = vpack.c.b16 %v669, %v668
  %v681 = vpack.c.b16 %v671, %v670
  %v682 = vpack.c.b16 %v673, %v672
  %v683 = vpack.c.b16 %v675, %v674
  %692 = vmatprep.subr.bf16.mxu0 0
  %693 = vmatpush1.bf16.msra.mxu0 %v676
  %694 = vmatprep.subr.bf16.mxu0 0
  %695 = vmatpush1.bf16.msra.mxu0 %v677
  %696 = vmatprep.subr.bf16.mxu0 0
  %697 = vmatpush1.bf16.msra.mxu0 %v678
  %698 = vmatprep.subr.bf16.mxu0 0
  %699 = vmatpush1.bf16.msra.mxu0 %v679
  %700 = vmatprep.subr.bf16.mxu0 0
  %701 = vmatpush1.bf16.msra.mxu0 %v680
  %702 = vmatprep.subr.bf16.mxu0 0
  %703 = vmatpush1.bf16.msra.mxu0 %v681
  %704 = vmatprep.subr.bf16.mxu0 0
  %705 = vmatpush1.bf16.msra.mxu0 %v682
  %706 = vmatprep.subr.bf16.mxu0 0
  %707 = vmatpush1.bf16.msra.mxu0 %v683
  %708 = vmatprep.subr.bf16.mxu0 0
  %709 = vmatpush1.bf16.msra.mxu0 0
  %710 = vmatprep.subr.bf16.mxu0 0
  %711 = vmatpush1.bf16.msra.mxu0 0
  %712 = vmatprep.subr.bf16.mxu0 0
  %713 = vmatpush1.bf16.msra.mxu0 0
  %714 = vmatprep.subr.bf16.mxu0 0
  %715 = vmatpush1.bf16.msra.mxu0 0
  %716 = vmatprep.subr.bf16.mxu0 0
  %717 = vmatpush1.bf16.msra.mxu0 0
  %718 = vmatprep.subr.bf16.mxu0 0
  %719 = vmatpush1.bf16.msra.mxu0 0
  %720 = vmatprep.subr.bf16.mxu0 0
  %721 = vmatpush1.bf16.msra.mxu0 0
  %722 = vmatprep.subr.bf16.mxu0 0
  %723 = vmatpush1.bf16.msra.mxu0 0
  %724 = vmatprep.mubr.bf16.mxu0 0
  %725 = vmatmul.mubr.bf16.gmra.mrb[0].mxu0 %v639
  %v726 = vpop.f32.mrb[0].mxu0
  %v727 = vadd.f32 %v643, %v726
  %v728 = vpop.f32.mrb[0].mxu0
  %v729 = vpop.f32.mrb[0].mxu0
  %v730 = vadd.f32 %v643, %v729
  %v731 = vpop.f32.mrb[0].mxu0
  %732 = vdwg.mxu0
  %733 = vst [vmem:[%s3] sm:$0xff] %v635
  %734 = vst [vmem:[%s3 + $0x8] sm:$0x3] %v636
  %735 = vst [vmem:[%s4] sm:$0xff] %v727
  %736 = vst [vmem:[%s4 + $0x8] sm:$0x3] %v730
  // Predicated region
  $region14: #{_lambda_.2} parent=0 // pred_check
    _
  $region15: #{_lambda_.2} parent=0 // pred_check_branch
    %738 = sbr.rel (0) target = $region17
  $region16: #{_lambda_.2} parent=0 // pred_region
    _
  $region17: #{_lambda_.2} parent=0 // pred_fallthru
    _
  // Predicated region
  $region18: #{_lambda_.2} parent=0 // pred_check
    _
  $region19: #{_lambda_.2} parent=0 // pred_check_branch
    %740 = sbr.rel (0) target = $region21
  $region20: #{_lambda_.2} parent=0 // pred_region
    _
  $region21: #{_lambda_.2} parent=0 // pred_fallthru
    _
  // Predicated region
  $region22: #{_lambda_.2} parent=0 // pred_check
    _
  $region23: #{_lambda_.2} parent=0 // pred_check_branch
    %742 = sbr.rel (0) target = $region25
  $region24: #{_lambda_.2} parent=0 // pred_region
    _
  $region25: #{_lambda_.2} parent=0 // pred_fallthru
    _
  // Predicated region
  $region26: #{_lambda_.2} parent=0 // pred_check
    _
  $region27: #{_lambda_.2} parent=0 // pred_check_branch
    %744 = sbr.rel (0) target = $region29
  $region28: #{_lambda_.2} parent=0 // pred_region
    _
  $region29: #{_lambda_.2} parent=0 // pred_fallthru
    _

// kernel: _lambda_.3
$region0: #{_lambda_.3}
  #allocation0 [shape = 'u32[]', space=smem, size = 0x4, offset = 0x4, fixed_abs, tag = 'smem constant byte address 0x4 - core index']
  #allocation1 [shape = 'u32[144,128]{1,0:T(1,128)}', space=vmem, size = 0x12000, scoped, tag = 'internal scratch']
  %s0 = inlined_call_operand.vmem [shape: f32[16,128], index: 0, kind: input, shape index: {}]
  %s1 = inlined_call_operand.vmem [shape: f32[16,128], index: 1, kind: input, shape index: {}]
  %s2 = inlined_call_operand.vmem [shape: f32[8,16,128], index: 2, kind: input, shape index: {}]
  %s3 = inlined_call_operand.vmem [shape: f32[8,16,128], index: 3, kind: input, shape index: {}]
  %s4 = inlined_call_operand.vmem [shape: bf16[384,128], index: 4, kind: input, shape index: {}]
  %s5 = inlined_call_operand.vmem [shape: f32[6,128], index: 5, kind: input, shape index: {}]
  %s6 = inlined_call_operand.vmem [shape: bf16[128,128], index: 6, kind: input, shape index: {}]
  %s7 = inlined_call_operand.vmem [shape: f32[1,128], index: 7, kind: input, shape index: {}]
  %s8 = inlined_call_operand.vmem [shape: bf16[128,128], index: 8, kind: input, shape index: {}]
  %s9 = inlined_call_operand.vmem [shape: f32[8,16,128], index: 9, kind: output, shape index: {}]
  %s10 = sld [smem:[#allocation0]]
  $region69: #{_lambda_.3} parent=0
    _
  %s12 = ssub.s32 1, %s10
  %s13 = scalar_select 0, %s12, %s10
  loop: start=0, step=1, limit=4
  $region2: #{_lambda_.3} parent=0 // loop_pre_header
    _
  $region3: #{_lambda_.3} parent=0 // loop_header
    %s15 = sphi 0, %s19
    %p16 = scmp.ge.s32.totalorder %s15, 4
    %s23 = sphi 0, %s23
    %s25 = sphi 0, %s23
    %s26 = sphi 0, %s25
    %s40 = sphi 0, %s26
    %s44 = sphi 0, %s44
    %s46 = sphi 0, %s44
    %s47 = sphi 0, %s46
    %s61 = sphi 0, %s47
    %s67 = sphi 0, %s69
    %s70 = sphi 0, %s67
    %s71 = sphi 0, %s70
    %s87 = sphi 0, %s71
    %s93 = sphi 0, %s95
    %s96 = sphi 0, %s93
    %s97 = sphi 0, %s96
    %s113 = sphi 0, %s97
    %s117 = sphi 0, %s117
    %s119 = sphi 0, %s117
    %s120 = sphi 0, %s119
    %s134 = sphi 0, %s120
    %s138 = sphi 0, %s138
    %s140 = sphi 0, %s138
    %s141 = sphi 0, %s140
    %s155 = sphi 0, %s141
    %s159 = sphi 0, %s159
    %s161 = sphi 0, %s159
    %s162 = sphi 0, %s161
    %s176 = sphi 0, %s162
    %s180 = sphi 0, %s180
    %s182 = sphi 0, %s180
    %s183 = sphi 0, %s182
    %s197 = sphi 0, %s183
    %s201 = sphi 0, %s201
    %s203 = sphi 0, %s201
    %s204 = sphi 0, %s203
    %s218 = sphi 0, %s204
    %s224 = sphi 0, %s226
    %s227 = sphi 0, %s224
    %s228 = sphi 0, %s227
    %s244 = sphi 0, %s228
  $region4: #{_lambda_.3} parent=0 // loop_header_branch
    %18 = sbr.rel (%p16) target = $region8
  $region5: #{_lambda_.3} parent=0 // loop_body
    %s20 = ssub.s32 %s15, 1
    %s21 = ssub.s32 %s15, 2
    %s22 = sadd.s32 %s15, 1
    %s24 = sadd.s32 %s23, 1
    %p27 = scmp.eq.s32.totalorder %s15, 1
    %p28 = scmp.ne.s32.totalorder %s23, %s25
    %p29 = scmp.eq.s32.totalorder %s15, 0
    %p30 = por %p28, %p29
    %p31 = scmp.ne.s32.totalorder %s23, %s25
    %p32 = scmp.eq.s32.totalorder %s20, 1
    %p33 = por %p31, %p32
    %p34 = scmp.ne.s32.totalorder %s25, %s26
    %p35 = scmp.eq.s32.totalorder %s20, 0
    %p36 = por %p34, %p35
    %p37 = scmp.ne.s32.totalorder %s25, %s26
    %p38 = scmp.eq.s32.totalorder %s21, 1
    %p39 = por %p37, %p38
    %p41 = scmp.ne.s32.totalorder %s26, %s40
    %p42 = scmp.eq.s32.totalorder %s21, 0
    %p43 = por %p41, %p42
    %s45 = sadd.s32 %s44, 1
    %p48 = scmp.eq.s32.totalorder %s15, 1
    %p49 = scmp.ne.s32.totalorder %s44, %s46
    %p50 = scmp.eq.s32.totalorder %s15, 0
    %p51 = por %p49, %p50
    %p52 = scmp.ne.s32.totalorder %s44, %s46
    %p53 = scmp.eq.s32.totalorder %s20, 1
    %p54 = por %p52, %p53
    %p55 = scmp.ne.s32.totalorder %s46, %s47
    %p56 = scmp.eq.s32.totalorder %s20, 0
    %p57 = por %p55, %p56
    %p58 = scmp.ne.s32.totalorder %s46, %s47
    %p59 = scmp.eq.s32.totalorder %s21, 1
    %p60 = por %p58, %p59
    %p62 = scmp.ne.s32.totalorder %s47, %s61
    %p63 = scmp.eq.s32.totalorder %s21, 0
    %p64 = por %p62, %p63
    %s65 = ssub.s32 %s15, %s22
    %p66 = scmp.eq.s32.totalorder %s65, 0
    %s68 = sadd.s32 %s67, 1
    %s69 = scalar_select %p66, %s67, %s68
    %p72 = pneg %p66
    %p73 = scmp.eq.s32.totalorder %s15, 1
    %p74 = por %p72, %p73
    %p75 = scmp.ne.s32.totalorder %s67, %s70
    %p76 = scmp.eq.s32.totalorder %s15, 0
    %p77 = por %p75, %p76
    %p78 = scmp.ne.s32.totalorder %s67, %s70
    %p79 = scmp.eq.s32.totalorder %s20, 1
    %p80 = por %p78, %p79
    %p81 = scmp.ne.s32.totalorder %s70, %s71
    %p82 = scmp.eq.s32.totalorder %s20, 0
    %p83 = por %p81, %p82
    %p84 = scmp.ne.s32.totalorder %s70, %s71
    %p85 = scmp.eq.s32.totalorder %s21, 1
    %p86 = por %p84, %p85
    %p88 = scmp.ne.s32.totalorder %s71, %s87
    %p89 = scmp.eq.s32.totalorder %s21, 0
    %p90 = por %p88, %p89
    %s91 = ssub.s32 %s15, %s22
    %p92 = scmp.eq.s32.totalorder %s91, 0
    %s94 = sadd.s32 %s93, 1
    %s95 = scalar_select %p92, %s93, %s94
    %p98 = pneg %p92
    %p99 = scmp.eq.s32.totalorder %s15, 1
    %p100 = por %p98, %p99
    %p101 = scmp.ne.s32.totalorder %s93, %s96
    %p102 = scmp.eq.s32.totalorder %s15, 0
    %p103 = por %p101, %p102
    %p104 = scmp.ne.s32.totalorder %s93, %s96
    %p105 = scmp.eq.s32.totalorder %s20, 1
    %p106 = por %p104, %p105
    %p107 = scmp.ne.s32.totalorder %s96, %s97
    %p108 = scmp.eq.s32.totalorder %s20, 0
    %p109 = por %p107, %p108
    %p110 = scmp.ne.s32.totalorder %s96, %s97
    %p111 = scmp.eq.s32.totalorder %s21, 1
    %p112 = por %p110, %p111
    %p114 = scmp.ne.s32.totalorder %s97, %s113
    %p115 = scmp.eq.s32.totalorder %s21, 0
    %p116 = por %p114, %p115
    %s118 = sadd.s32 %s117, 1
    %p121 = scmp.eq.s32.totalorder %s15, 1
    %p122 = scmp.ne.s32.totalorder %s117, %s119
    %p123 = scmp.eq.s32.totalorder %s15, 0
    %p124 = por %p122, %p123
    %p125 = scmp.ne.s32.totalorder %s117, %s119
    %p126 = scmp.eq.s32.totalorder %s20, 1
    %p127 = por %p125, %p126
    %p128 = scmp.ne.s32.totalorder %s119, %s120
    %p129 = scmp.eq.s32.totalorder %s20, 0
    %p130 = por %p128, %p129
    %p131 = scmp.ne.s32.totalorder %s119, %s120
    %p132 = scmp.eq.s32.totalorder %s21, 1
    %p133 = por %p131, %p132
    %p135 = scmp.ne.s32.totalorder %s120, %s134
    %p136 = scmp.eq.s32.totalorder %s21, 0
    %p137 = por %p135, %p136
    %s139 = sadd.s32 %s138, 1
    %p142 = scmp.eq.s32.totalorder %s15, 1
    %p143 = scmp.ne.s32.totalorder %s138, %s140
    %p144 = scmp.eq.s32.totalorder %s15, 0
    %p145 = por %p143, %p144
    %p146 = scmp.ne.s32.totalorder %s138, %s140
    %p147 = scmp.eq.s32.totalorder %s20, 1
    %p148 = por %p146, %p147
    %p149 = scmp.ne.s32.totalorder %s140, %s141
    %p150 = scmp.eq.s32.totalorder %s20, 0
    %p151 = por %p149, %p150
    %p152 = scmp.ne.s32.totalorder %s140, %s141
    %p153 = scmp.eq.s32.totalorder %s21, 1
    %p154 = por %p152, %p153
    %p156 = scmp.ne.s32.totalorder %s141, %s155
    %p157 = scmp.eq.s32.totalorder %s21, 0
    %p158 = por %p156, %p157
    %s160 = sadd.s32 %s159, 1
    %p163 = scmp.eq.s32.totalorder %s15, 1
    %p164 = scmp.ne.s32.totalorder %s159, %s161
    %p165 = scmp.eq.s32.totalorder %s15, 0
    %p166 = por %p164, %p165
    %p167 = scmp.ne.s32.totalorder %s159, %s161
    %p168 = scmp.eq.s32.totalorder %s20, 1
    %p169 = por %p167, %p168
    %p170 = scmp.ne.s32.totalorder %s161, %s162
    %p171 = scmp.eq.s32.totalorder %s20, 0
    %p172 = por %p170, %p171
    %p173 = scmp.ne.s32.totalorder %s161, %s162
    %p174 = scmp.eq.s32.totalorder %s21, 1
    %p175 = por %p173, %p174
    %p177 = scmp.ne.s32.totalorder %s162, %s176
    %p178 = scmp.eq.s32.totalorder %s21, 0
    %p179 = por %p177, %p178
    %s181 = sadd.s32 %s180, 1
    %p184 = scmp.eq.s32.totalorder %s15, 1
    %p185 = scmp.ne.s32.totalorder %s180, %s182
    %p186 = scmp.eq.s32.totalorder %s15, 0
    %p187 = por %p185, %p186
    %p188 = scmp.ne.s32.totalorder %s180, %s182
    %p189 = scmp.eq.s32.totalorder %s20, 1
    %p190 = por %p188, %p189
    %p191 = scmp.ne.s32.totalorder %s182, %s183
    %p192 = scmp.eq.s32.totalorder %s20, 0
    %p193 = por %p191, %p192
    %p194 = scmp.ne.s32.totalorder %s182, %s183
    %p195 = scmp.eq.s32.totalorder %s21, 1
    %p196 = por %p194, %p195
    %p198 = scmp.ne.s32.totalorder %s183, %s197
    %p199 = scmp.eq.s32.totalorder %s21, 0
    %p200 = por %p198, %p199
    %s202 = sadd.s32 %s201, 1
    %p205 = scmp.eq.s32.totalorder %s15, 1
    %p206 = scmp.ne.s32.totalorder %s201, %s203
    %p207 = scmp.eq.s32.totalorder %s15, 0
    %p208 = por %p206, %p207
    %p209 = scmp.ne.s32.totalorder %s201, %s203
    %p210 = scmp.eq.s32.totalorder %s20, 1
    %p211 = por %p209, %p210
    %p212 = scmp.ne.s32.totalorder %s203, %s204
    %p213 = scmp.eq.s32.totalorder %s20, 0
    %p214 = por %p212, %p213
    %p215 = scmp.ne.s32.totalorder %s203, %s204
    %p216 = scmp.eq.s32.totalorder %s21, 1
    %p217 = por %p215, %p216
    %p219 = scmp.ne.s32.totalorder %s204, %s218
    %p220 = scmp.eq.s32.totalorder %s21, 0
    %p221 = por %p219, %p220
    %s222 = ssub.s32 %s15, %s22
    %p223 = scmp.eq.s32.totalorder %s222, 0
    %s225 = sadd.s32 %s224, 1
    %s226 = scalar_select %p223, %s224, %s225
    %p229 = pneg %p223
    %p230 = scmp.eq.s32.totalorder %s15, 1
    %p231 = por %p229, %p230
    %p232 = scmp.ne.s32.totalorder %s224, %s227
    %p233 = scmp.eq.s32.totalorder %s15, 0
    %p234 = por %p232, %p233
    %p235 = scmp.ne.s32.totalorder %s224, %s227
    %p236 = scmp.eq.s32.totalorder %s20, 1
    %p237 = por %p235, %p236
    %p238 = scmp.ne.s32.totalorder %s227, %s228
    %p239 = scmp.eq.s32.totalorder %s20, 0
    %p240 = por %p238, %p239
    %p241 = scmp.ne.s32.totalorder %s227, %s228
    %p242 = scmp.eq.s32.totalorder %s21, 1
    %p243 = por %p241, %p242
    %p245 = scmp.ne.s32.totalorder %s228, %s244
    %p246 = scmp.eq.s32.totalorder %s21, 0
    %p247 = por %p245, %p246
    %p248 = scmp.le.s32.totalorder 1, %s15
    %p249 = scmp.lt.s32.totalorder %s15, 3
    %p250 = pnand %p248, %p249
    %p251 = pneg %p250
    // Predicated region
    $region9: #{_lambda_.3} parent=5 // pred_check
      _
    $region10: #{_lambda_.3} parent=5 // pred_check_branch
      %253 = sbr.rel (%p250) target = $region12
    $region11: #{_lambda_.3} parent=5 // pred_region
      %s254 = ssub.s32 %s15, 1
      // Predicated region
      $region13: #{_lambda_.3} parent=11 // pred_check
        %p255 = pneg %p36
      $region14: #{_lambda_.3} parent=11 // pred_check_branch
        %257 = sbr.rel (%p255) target = $region16
      $region15: #{_lambda_.3} parent=11 // pred_region
        _
      $region16: #{_lambda_.3} parent=11 // pred_fallthru
        _
      // Predicated region
      $region17: #{_lambda_.3} parent=11 // pred_check
        %p258 = pneg %p57
      $region18: #{_lambda_.3} parent=11 // pred_check_branch
        %260 = sbr.rel (%p258) target = $region20
      $region19: #{_lambda_.3} parent=11 // pred_region
        _
      $region20: #{_lambda_.3} parent=11 // pred_fallthru
        _
      // Predicated region
      $region21: #{_lambda_.3} parent=11 // pred_check
        %p261 = pneg %p130
      $region22: #{_lambda_.3} parent=11 // pred_check_branch
        %263 = sbr.rel (%p261) target = $region24
      $region23: #{_lambda_.3} parent=11 // pred_region
        _
      $region24: #{_lambda_.3} parent=11 // pred_fallthru
        _
      // Predicated region
      $region25: #{_lambda_.3} parent=11 // pred_check
        %p264 = pneg %p151
      $region26: #{_lambda_.3} parent=11 // pred_check_branch
        %266 = sbr.rel (%p264) target = $region28
      $region27: #{_lambda_.3} parent=11 // pred_region
        _
      $region28: #{_lambda_.3} parent=11 // pred_fallthru
        _
      // Predicated region
      $region29: #{_lambda_.3} parent=11 // pred_check
        %p267 = pneg %p172
      $region30: #{_lambda_.3} parent=11 // pred_check_branch
        %269 = sbr.rel (%p267) target = $region32
      $region31: #{_lambda_.3} parent=11 // pred_region
        _
      $region32: #{_lambda_.3} parent=11 // pred_fallthru
        _
      // Predicated region
      $region33: #{_lambda_.3} parent=11 // pred_check
        %p270 = pneg %p193
      $region34: #{_lambda_.3} parent=11 // pred_check_branch
        %272 = sbr.rel (%p270) target = $region36
      $region35: #{_lambda_.3} parent=11 // pred_region
        _
      $region36: #{_lambda_.3} parent=11 // pred_fallthru
        _
      // Predicated region
      $region37: #{_lambda_.3} parent=11 // pred_check
        %p273 = pneg %p214
      $region38: #{_lambda_.3} parent=11 // pred_check_branch
        %275 = sbr.rel (%p273) target = $region40
      $region39: #{_lambda_.3} parent=11 // pred_region
        _
      $region40: #{_lambda_.3} parent=11 // pred_fallthru
        _
    $region12: #{_lambda_.3} parent=5 // pred_fallthru
      _
    %p276 = scmp.lt.s32.totalorder %s15, 2
    // Predicated region
    $region41: #{_lambda_.3} parent=5 // pred_check
      %p277 = pneg %p276
    $region42: #{_lambda_.3} parent=5 // pred_check_branch
      %279 = sbr.rel (%p277) target = $region44
    $region43: #{_lambda_.3} parent=5 // pred_region
      // Predicated region
      $region45: #{_lambda_.3} parent=43 // pred_check
        %p280 = pneg %p77
      $region46: #{_lambda_.3} parent=43 // pred_check_branch
        %282 = sbr.rel (%p280) target = $region48
      $region47: #{_lambda_.3} parent=43 // pred_region
        %s283 = smul.u32 4, %s15
        %p284 = scmp.lt.s32.totalorder %s283, 7
        %s285 = scalar_select %p284, %s283, 7
        %s286 = smul.addr %s285, 2
        %s287 = smul.addr %s286, 8
        %s288 = scalar_lea.vmem %s2, %s287
        %s289 = smul.u32 4, %s15
      $region48: #{_lambda_.3} parent=43 // pred_fallthru
        _
      // Predicated region
      $region49: #{_lambda_.3} parent=43 // pred_check
        %p290 = pneg %p103
      $region50: #{_lambda_.3} parent=43 // pred_check_branch
        %292 = sbr.rel (%p290) target = $region52
      $region51: #{_lambda_.3} parent=43 // pred_region
        %s293 = smul.u32 4, %s15
        %p294 = scmp.lt.s32.totalorder %s293, 7
        %s295 = scalar_select %p294, %s293, 7
        %s296 = smul.addr %s295, 2
        %s297 = smul.addr %s296, 8
        %s298 = scalar_lea.vmem %s3, %s297
        %s299 = smul.u32 4, %s15
      $region52: #{_lambda_.3} parent=43 // pred_fallthru
        _
    $region44: #{_lambda_.3} parent=5 // pred_fallthru
      _
    %p300 = scmp.le.s32.totalorder 1, %s15
    %p301 = scmp.lt.s32.totalorder %s15, 3
    %p302 = pnand %p300, %p301
    %p303 = pneg %p302
    // Predicated region
    $region53: #{_lambda_.3} parent=5 // pred_check
      _
    $region54: #{_lambda_.3} parent=5 // pred_check_branch
      %305 = sbr.rel (%p302) target = $region56
    $region55: #{_lambda_.3} parent=5 // pred_region
      %s306 = ssub.s32 %s15, 1
      %p307 = pneg %p36
      %p308 = pneg %p33
      %p309 = pneg %p57
      %p310 = pneg %p54
      %s311 = smul.u32 4, %s20
      %p312 = scmp.lt.s32.totalorder %s311, 7
      %s313 = scalar_select %p312, %s311, 7
      %s314 = smul.addr %s313, 2
      %s315 = smul.addr %s314, 8
      %s316 = scalar_lea.vmem %s2, %s315
      %p317 = pneg %p83
      %p318 = pneg %p80
      %s319 = smul.u32 4, %s20
      %p320 = scmp.lt.s32.totalorder %s319, 7
      %s321 = scalar_select %p320, %s319, 7
      %s322 = smul.addr %s321, 2
      %s323 = smul.addr %s322, 8
      %s324 = scalar_lea.vmem %s3, %s323
      %p325 = pneg %p109
      %p326 = pneg %p106
      %p327 = pneg %p130
      %p328 = pneg %p127
      %p329 = pneg %p151
      %p330 = pneg %p148
      %p331 = pneg %p172
      %p332 = pneg %p169
      %p333 = pneg %p193
      %p334 = pneg %p190
      %p335 = pneg %p214
      %p336 = pneg %p211
      %p337 = pneg %p240
      %p338 = pneg %p237
      %s339 = smul.u32 4, %s20
      %p340 = scmp.lt.s32.totalorder %s339, 7
      %s341 = scalar_select %p340, %s339, 7
      %s342 = smul.addr %s341, 2
      %s343 = smul.addr %s342, 8
      %s344 = scalar_lea.vmem %s9, %s343
      %s345 = smul.u32 4, %s20
      %p346 = scmp.lt.s32.totalorder %s345, 7
      %s347 = scalar_select %p346, %s345, 7
      %s348 = smul.addr %s347, 2
      %s349 = smul.addr %s348, 8
      %s350 = scalar_lea.vmem %s2, %s349
      %s351 = smul.u32 4, %s20
      %s352 = smul.u32 4, %s20
      %p353 = scmp.lt.s32.totalorder %s352, 7
      %s354 = scalar_select %p353, %s352, 7
      %s355 = smul.addr %s354, 2
      %s356 = smul.addr %s355, 8
      %s357 = scalar_lea.vmem %s3, %s356
      %s358 = smul.u32 4, %s20
      %s359 = smul.u32 4, %s20
      %p360 = scmp.lt.s32.totalorder %s359, 7
      %s361 = scalar_select %p360, %s359, 7
      %s362 = smul.addr %s361, 2
      %s363 = smul.addr %s362, 8
      %s364 = scalar_lea.vmem %s9, %s363
      %s365 = smul.u32 4, %s20
      %v367 = vld [vmem:[%s4] sm:$0xf]
      %v368 = vld [vmem:[%s4 + $0x4] sm:$0xf]
      %v369 = vld [vmem:[%s4 + $0x8] sm:$0xf]
      %v370 = vld [vmem:[%s4 + $0xc] sm:$0xf]
      %v371 = vld [vmem:[%s4 + $0x10] sm:$0xf]
      %v372 = vld [vmem:[%s4 + $0x14] sm:$0xf]
      %v373 = vld [vmem:[%s4 + $0x18] sm:$0xf]
      %v374 = vld [vmem:[%s4 + $0x1c] sm:$0xf]
      %v375 = vld [vmem:[%s4 + $0x20] sm:$0xf]
      %v376 = vld [vmem:[%s4 + $0x24] sm:$0xf]
      %v377 = vld [vmem:[%s4 + $0x28] sm:$0xf]
      %v378 = vld [vmem:[%s4 + $0x2c] sm:$0xf]
      %v379 = vld [vmem:[%s4 + $0x30] sm:$0xf]
      %v380 = vld [vmem:[%s4 + $0x34] sm:$0xf]
      %v381 = vld [vmem:[%s4 + $0x38] sm:$0xf]
      %v382 = vld [vmem:[%s4 + $0x3c] sm:$0xf]
      %v383 = vld [vmem:[%s4 + $0x40] sm:$0xf]
      %v384 = vld [vmem:[%s4 + $0x44] sm:$0xf]
      %v385 = vld [vmem:[%s4 + $0x48] sm:$0xf]
      %v386 = vld [vmem:[%s4 + $0x4c] sm:$0xf]
      %v387 = vld [vmem:[%s4 + $0x50] sm:$0xf]
      %v388 = vld [vmem:[%s4 + $0x54] sm:$0xf]
      %v389 = vld [vmem:[%s4 + $0x58] sm:$0xf]
      %v390 = vld [vmem:[%s4 + $0x5c] sm:$0xf]
      %v391 = vld [vmem:[%s4 + $0x60] sm:$0xf]
      %v392 = vld [vmem:[%s4 + $0x64] sm:$0xf]
      %v393 = vld [vmem:[%s4 + $0x68] sm:$0xf]
      %v394 = vld [vmem:[%s4 + $0x6c] sm:$0xf]
      %v395 = vld [vmem:[%s4 + $0x70] sm:$0xf]
      %v396 = vld [vmem:[%s4 + $0x74] sm:$0xf]
      %v397 = vld [vmem:[%s4 + $0x78] sm:$0xf]
      %v398 = vld [vmem:[%s4 + $0x7c] sm:$0xf]
      %v399 = vld [vmem:[%s4 + $0x80] sm:$0xf]
      %v400 = vld [vmem:[%s4 + $0x84] sm:$0xf]
      %v401 = vld [vmem:[%s4 + $0x88] sm:$0xf]
      %v402 = vld [vmem:[%s4 + $0x8c] sm:$0xf]
      %v403 = vld [vmem:[%s4 + $0x90] sm:$0xf]
      %v404 = vld [vmem:[%s4 + $0x94] sm:$0xf]
      %v405 = vld [vmem:[%s4 + $0x98] sm:$0xf]
      %v406 = vld [vmem:[%s4 + $0x9c] sm:$0xf]
      %v407 = vld [vmem:[%s4 + $0xa0] sm:$0xf]
      %v408 = vld [vmem:[%s4 + $0xa4] sm:$0xf]
      %v409 = vld [vmem:[%s4 + $0xa8] sm:$0xf]
      %v410 = vld [vmem:[%s4 + $0xac] sm:$0xf]
      %v411 = vld [vmem:[%s4 + $0xb0] sm:$0xf]
      %v412 = vld [vmem:[%s4 + $0xb4] sm:$0xf]
      %v413 = vld [vmem:[%s4 + $0xb8] sm:$0xf]
      %v414 = vld [vmem:[%s4 + $0xbc] sm:$0xf]
      %v415 = vld [vmem:[%s5] sm:$0x1]
      %v416 = vld [vmem:[%s5 + $0x1] sm:$0x1]
      %v417 = vld [vmem:[%s5 + $0x2] sm:$0x1]
      %v418 = vld [vmem:[%s5 + $0x3] sm:$0x1]
      %v419 = vld [vmem:[%s5 + $0x4] sm:$0x1]
      %v420 = vld [vmem:[%s5 + $0x5] sm:$0x1]
      %v421 = vld [vmem:[%s350] sm:$0xff]
      %v422 = vld [vmem:[%s350 + $0x8] sm:$0xff]
      %v423 = vld [vmem:[%s350 + $0x10] sm:$0xff]
      %v424 = vld [vmem:[%s350 + $0x18] sm:$0xff]
      %v425 = vld [vmem:[%s350 + $0x20] sm:$0xff]
      %v426 = vld [vmem:[%s350 + $0x28] sm:$0xff]
      %v427 = vld [vmem:[%s350 + $0x30] sm:$0xff]
      %v428 = vld [vmem:[%s350 + $0x38] sm:$0xff]
      %v429 = vld [vmem:[%s357] sm:$0xff]
      %v430 = vld [vmem:[%s357 + $0x8] sm:$0xff]
      %v431 = vld [vmem:[%s357 + $0x10] sm:$0xff]
      %v432 = vld [vmem:[%s357 + $0x18] sm:$0xff]
      %v433 = vld [vmem:[%s357 + $0x20] sm:$0xff]
      %v434 = vld [vmem:[%s357 + $0x28] sm:$0xff]
      %v435 = vld [vmem:[%s357 + $0x30] sm:$0xff]
      %v436 = vld [vmem:[%s357 + $0x38] sm:$0xff]
      %v437 = vadd.f32 %v429, %v421
      %v438 = vadd.f32 %v430, %v422
      %v439 = vadd.f32 %v431, %v423
      %v440 = vadd.f32 %v432, %v424
      %v441 = vadd.f32 %v433, %v425
      %v442 = vadd.f32 %v434, %v426
      %v443 = vadd.f32 %v435, %v427
      %v444 = vadd.f32 %v436, %v428
      %v445 = vpack.c.bf16 %v438, %v437
      %v446 = vpack.c.bf16 %v440, %v439
      %v447 = vpack.c.bf16 %v442, %v441
      %v448 = vpack.c.bf16 %v444, %v443
      %v449 = vlaneseq
      %v450 = vshrl.u32 %v449, 7
      %v451 = vsub.s32 0, %v450
      %v452 = vrot.slane %v415, %v451
      %v469 = vunpack.c.l.b16 %v367
      %v470 = vunpack.c.l.b16 %v368
      %v471 = vunpack.c.l.b16 %v369
      %v472 = vunpack.c.l.b16 %v370
      %v473 = vunpack.c.l.b16 %v371
      %v474 = vunpack.c.l.b16 %v372
      %v475 = vunpack.c.l.b16 %v373
      %v476 = vunpack.c.l.b16 %v374
      %v477 = vunpack.c.l.b16 %v375
      %v478 = vunpack.c.l.b16 %v376
      %v479 = vunpack.c.l.b16 %v377
      %v480 = vunpack.c.l.b16 %v378
      %v481 = vunpack.c.l.b16 %v379
      %v482 = vunpack.c.l.b16 %v380
      %v483 = vunpack.c.l.b16 %v381
      %v484 = vunpack.c.l.b16 %v382
      %v485 = vpack.c.b16 %v470, %v469
      %v486 = vpack.c.b16 %v472, %v471
      %v487 = vpack.c.b16 %v474, %v473
      %v488 = vpack.c.b16 %v476, %v475
      %v489 = vpack.c.b16 %v478, %v477
      %v490 = vpack.c.b16 %v480, %v479
      %v491 = vpack.c.b16 %v482, %v481
      %v492 = vpack.c.b16 %v484, %v483
      %501 = vmatprep.subr.bf16.mxu0 0
      %502 = vmatpush1.bf16.msra.mxu0 %v485
      %503 = vmatprep.subr.bf16.mxu0 0
      %504 = vmatpush1.bf16.msra.mxu0 %v486
      %505 = vmatprep.subr.bf16.mxu0 0
      %506 = vmatpush1.bf16.msra.mxu0 %v487
      %507 = vmatprep.subr.bf16.mxu0 0
      %508 = vmatpush1.bf16.msra.mxu0 %v488
      %509 = vmatprep.subr.bf16.mxu0 0
      %510 = vmatpush1.bf16.msra.mxu0 %v489
      %511 = vmatprep.subr.bf16.mxu0 0
      %512 = vmatpush1.bf16.msra.mxu0 %v490
      %513 = vmatprep.subr.bf16.mxu0 0
      %514 = vmatpush1.bf16.msra.mxu0 %v491
      %515 = vmatprep.subr.bf16.mxu0 0
      %516 = vmatpush1.bf16.msra.mxu0 %v492
      %517 = vmatprep.subr.bf16.mxu0 0
      %518 = vmatpush1.bf16.msra.mxu0 0
      %519 = vmatprep.subr.bf16.mxu0 0
      %520 = vmatpush1.bf16.msra.mxu0 0
      %521 = vmatprep.subr.bf16.mxu0 0
      %522 = vmatpush1.bf16.msra.mxu0 0
      %523 = vmatprep.subr.bf16.mxu0 0
      %524 = vmatpush1.bf16.msra.mxu0 0
      %525 = vmatprep.subr.bf16.mxu0 0
      %526 = vmatpush1.bf16.msra.mxu0 0
      %527 = vmatprep.subr.bf16.mxu0 0
      %528 = vmatpush1.bf16.msra.mxu0 0
      %529 = vmatprep.subr.bf16.mxu0 0
      %530 = vmatpush1.bf16.msra.mxu0 0
      %531 = vmatprep.subr.bf16.mxu0 0
      %532 = vmatpush1.bf16.msra.mxu0 0
      %533 = vmatprep.mubr.bf16.mxu0 0
      %534 = vmatmul.mubr.bf16.gmra.mrb[0].mxu0 %v445
      %v535 = vpop.f32.mrb[0].mxu0
      %v536 = vadd.f32 %v452, %v535
      %v537 = vpop.f32.mrb[0].mxu0
      %v538 = vpop.f32.mrb[0].mxu0
      %v539 = vadd.f32 %v452, %v538
      %v540 = vpop.f32.mrb[0].mxu0
      %541 = vmatprep.mubr.bf16.mxu0 0
      %542 = vmatmul.mubr.bf16.gmra.mrb[0].mxu0 %v446
      %v543 = vpop.f32.mrb[0].mxu0
      %v544 = vadd.f32 %v452, %v543
      %v545 = vpop.f32.mrb[0].mxu0
      %v546 = vpop.f32.mrb[0].mxu0
      %v547 = vadd.f32 %v452, %v546
      %v548 = vpop.f32.mrb[0].mxu0
      %549 = vmatprep.mubr.bf16.mxu0 0
      %550 = vmatmul.mubr.bf16.gmra.mrb[0].mxu0 %v447
      %v551 = vpop.f32.mrb[0].mxu0
      %v552 = vadd.f32 %v452, %v551
      %v553 = vpop.f32.mrb[0].mxu0
      %v554 = vpop.f32.mrb[0].mxu0
      %v555 = vadd.f32 %v452, %v554
      %v556 = vpop.f32.mrb[0].mxu0
      %557 = vmatprep.mubr.bf16.mxu0 0
      %558 = vmatmul.mubr.bf16.gmra.mrb[0].mxu0 %v448
      %v559 = vpop.f32.mrb[0].mxu0
      %v560 = vadd.f32 %v452, %v559
      %v561 = vpop.f32.mrb[0].mxu0
      %v562 = vpop.f32.mrb[0].mxu0
      %v563 = vadd.f32 %v452, %v562
      %v564 = vpop.f32.mrb[0].mxu0
      %565 = vdwg.mxu0
      %v566 = vpack.c.bf16 %v422, %v421
      %v567 = vpack.c.bf16 %v424, %v423
      %v568 = vpack.c.bf16 %v426, %v425
      %v569 = vpack.c.bf16 %v428, %v427
      %v570 = vlaneseq
      %v571 = vshrl.u32 %v570, 7
      %v572 = vsub.s32 0, %v571
      %v573 = vrot.slane %v416, %v572
      %v590 = vunpack.c.l.b16 %v383
      %v591 = vunpack.c.l.b16 %v384
      %v592 = vunpack.c.l.b16 %v385
      %v593 = vunpack.c.l.b16 %v386
      %v594 = vunpack.c.l.b16 %v387
      %v595 = vunpack.c.l.b16 %v388
      %v596 = vunpack.c.l.b16 %v389
      %v597 = vunpack.c.l.b16 %v390
      %v598 = vunpack.c.l.b16 %v391
      %v599 = vunpack.c.l.b16 %v392
      %v600 = vunpack.c.l.b16 %v393
      %v601 = vunpack.c.l.b16 %v394
      %v602 = vunpack.c.l.b16 %v395
      %v603 = vunpack.c.l.b16 %v396
      %v604 = vunpack.c.l.b16 %v397
      %v605 = vunpack.c.l.b16 %v398
      %v606 = vpack.c.b16 %v591, %v590
      %v607 = vpack.c.b16 %v593, %v592
      %v608 = vpack.c.b16 %v595, %v594
      %v609 = vpack.c.b16 %v597, %v596
      %v610 = vpack.c.b16 %v599, %v598
      %v611 = vpack.c.b16 %v601, %v600
      %v612 = vpack.c.b16 %v603, %v602
      %v613 = vpack.c.b16 %v605, %v604
      %622 = vmatprep.subr.bf16.mxu0 0
      %623 = vmatpush1.bf16.msra.mxu0 %v606
      %624 = vmatprep.subr.bf16.mxu0 0
      %625 = vmatpush1.bf16.msra.mxu0 %v607
      %626 = vmatprep.subr.bf16.mxu0 0
      %627 = vmatpush1.bf16.msra.mxu0 %v608
      %628 = vmatprep.subr.bf16.mxu0 0
      %629 = vmatpush1.bf16.msra.mxu0 %v609
      %630 = vmatprep.subr.bf16.mxu0 0
      %631 = vmatpush1.bf16.msra.mxu0 %v610
      %632 = vmatprep.subr.bf16.mxu0 0
      %633 = vmatpush1.bf16.msra.mxu0 %v611
      %634 = vmatprep.subr.bf16.mxu0 0
      %635 = vmatpush1.bf16.msra.mxu0 %v612
      %636 = vmatprep.subr.bf16.mxu0 0
      %637 = vmatpush1.bf16.msra.mxu0 %v613
      %638 = vmatprep.subr.bf16.mxu0 0
      %639 = vmatpush1.bf16.msra.mxu0 0
      %640 = vmatprep.subr.bf16.mxu0 0
      %641 = vmatpush1.bf16.msra.mxu0 0
      %642 = vmatprep.subr.bf16.mxu0 0
      %643 = vmatpush1.bf16.msra.mxu0 0
      %644 = vmatprep.subr.bf16.mxu0 0
      %645 = vmatpush1.bf16.msra.mxu0 0
      %646 = vmatprep.subr.bf16.mxu0 0
      %647 = vmatpush1.bf16.msra.mxu0 0
      %648 = vmatprep.subr.bf16.mxu0 0
      %649 = vmatpush1.bf16.msra.mxu0 0
      %650 = vmatprep.subr.bf16.mxu0 0
      %651 = vmatpush1.bf16.msra.mxu0 0
      %652 = vmatprep.subr.bf16.mxu0 0
      %653 = vmatpush1.bf16.msra.mxu0 0
      %654 = vmatprep.mubr.bf16.mxu0 0
      %655 = vmatmul.mubr.bf16.gmra.mrb[0].mxu0 %v566
      %v656 = vpop.f32.mrb[0].mxu0
      %v657 = vadd.f32 %v573, %v656
      %v658 = vpop.f32.mrb[0].mxu0
      %v659 = vpop.f32.mrb[0].mxu0
      %v660 = vadd.f32 %v573, %v659
      %v661 = vpop.f32.mrb[0].mxu0
      %662 = vmatprep.mubr.bf16.mxu0 0
      %663 = vmatmul.mubr.bf16.gmra.mrb[0].mxu0 %v567
      %v664 = vpop.f32.mrb[0].mxu0
      %v665 = vadd.f32 %v573, %v664
      %v666 = vpop.f32.mrb[0].mxu0
      %v667 = vpop.f32.mrb[0].mxu0
      %v668 = vadd.f32 %v573, %v667
      %v669 = vpop.f32.mrb[0].mxu0
      %670 = vmatprep.mubr.bf16.mxu0 0
      %671 = vmatmul.mubr.bf16.gmra.mrb[0].mxu0 %v568
      %v672 = vpop.f32.mrb[0].mxu0
      %v673 = vadd.f32 %v573, %v672
      %v674 = vpop.f32.mrb[0].mxu0
      %v675 = vpop.f32.mrb[0].mxu0
      %v676 = vadd.f32 %v573, %v675
      %v677 = vpop.f32.mrb[0].mxu0
      %678 = vmatprep.mubr.bf16.mxu0 0
      %679 = vmatmul.mubr.bf16.gmra.mrb[0].mxu0 %v569
      %v680 = vpop.f32.mrb[0].mxu0
      %v681 = vadd.f32 %v573, %v680
      %v682 = vpop.f32.mrb[0].mxu0
      %v683 = vpop.f32.mrb[0].mxu0
      %v684 = vadd.f32 %v573, %v683
      %v685 = vpop.f32.mrb[0].mxu0
      %686 = vdwg.mxu0
      %v687 = vld [vmem:[%s0] sm:$0xff]
      %v688 = vld [vmem:[%s0 + $0x8] sm:$0xff]
      %v689 = vpack.c.bf16 %v688, %v687
      %v690 = vpack.c.bf16 %v539, %v536
      %v691 = vpack.c.bf16 %v547, %v544
      %v692 = vpack.c.bf16 %v555, %v552
      %v693 = vpack.c.bf16 %v563, %v560
      %694 = vmatprep.subr.bf16.mxu0 0
      %695 = vmatpush1.bf16.xpose.msra.mxu0 %v690
      %696 = vmatprep.subr.bf16.mxu0 0
      %697 = vmatpush1.bf16.xpose.msra.mxu0 0
      %698 = vmatprep.subr.bf16.mxu0 0
      %699 = vmatpush1.bf16.xpose.msra.mxu0 0
      %700 = vmatprep.subr.bf16.mxu0 0
      %701 = vmatpush1.bf16.xpose.msra.mxu0 0
      %702 = vmatprep.subr.bf16.mxu0 0
      %703 = vmatpush1.bf16.xpose.msra.mxu0 0
      %704 = vmatprep.subr.bf16.mxu0 0
      %705 = vmatpush1.bf16.xpose.msra.mxu0 0
      %706 = vmatprep.subr.bf16.mxu0 0
      %707 = vmatpush1.bf16.xpose.msra.mxu0 0
      %708 = vmatprep.subr.bf16.mxu0 0
      %709 = vmatpush1.bf16.xpose.msra.mxu0 0
      %710 = vmatprep.subr.bf16.mxu0 0
      %711 = vmatpush1.bf16.xpose.msra.mxu0 0
      %712 = vmatprep.subr.bf16.mxu0 0
      %713 = vmatpush1.bf16.xpose.msra.mxu0 0
      %714 = vmatprep.subr.bf16.mxu0 0
      %715 = vmatpush1.bf16.xpose.msra.mxu0 0
      %716 = vmatprep.subr.bf16.mxu0 0
      %717 = vmatpush1.bf16.xpose.msra.mxu0 0
      %718 = vmatprep.subr.bf16.mxu0 0
      %719 = vmatpush1.bf16.xpose.msra.mxu0 0
      %720 = vmatprep.subr.bf16.mxu0 0
      %721 = vmatpush1.bf16.xpose.msra.mxu0 0
      %722 = vmatprep.subr.bf16.mxu0 0
      %723 = vmatpush1.bf16.xpose.msra.mxu0 0
      %724 = vmatprep.subr.bf16.mxu0 0
      %725 = vmatpush1.bf16.xpose.msra.mxu0 0
      %726 = vmatprep.mubr.bf16.mxu0 0
      %727 = vmatmul.mubr.bf16.gmra.mrb[0].mxu0 %v689
      %v728 = vpop.f32.mrb[0].mxu0
      %v729 = vadd.f32 0.0, %v728
      %v730 = vpop.f32.mrb[0].mxu0
      %v731 = vpop.f32.mrb[0].mxu0
      %v732 = vadd.f32 0.0, %v731
      %v733 = vpop.f32.mrb[0].mxu0
      %734 = vdwg.mxu0
      %735 = vmatprep.subr.bf16.mxu0 0
      %736 = vmatpush1.bf16.xpose.msra.mxu0 %v691
      %737 = vmatprep.subr.bf16.mxu0 0
      %738 = vmatpush1.bf16.xpose.msra.mxu0 0
      %739 = vmatprep.subr.bf16.mxu0 0
      %740 = vmatpush1.bf16.xpose.msra.mxu0 0
      %741 = vmatprep.subr.bf16.mxu0 0
      %742 = vmatpush1.bf16.xpose.msra.mxu0 0
      %743 = vmatprep.subr.bf16.mxu0 0
      %744 = vmatpush1.bf16.xpose.msra.mxu0 0
      %745 = vmatprep.subr.bf16.mxu0 0
      %746 = vmatpush1.bf16.xpose.msra.mxu0 0
      %747 = vmatprep.subr.bf16.mxu0 0
      %748 = vmatpush1.bf16.xpose.msra.mxu0 0
      %749 = vmatprep.subr.bf16.mxu0 0
      %750 = vmatpush1.bf16.xpose.msra.mxu0 0
      %751 = vmatprep.subr.bf16.mxu0 0
      %752 = vmatpush1.bf16.xpose.msra.mxu0 0
      %753 = vmatprep.subr.bf16.mxu0 0
      %754 = vmatpush1.bf16.xpose.msra.mxu0 0
      %755 = vmatprep.subr.bf16.mxu0 0
      %756 = vmatpush1.bf16.xpose.msra.mxu0 0
      %757 = vmatprep.subr.bf16.mxu0 0
      %758 = vmatpush1.bf16.xpose.msra.mxu0 0
      %759 = vmatprep.subr.bf16.mxu0 0
      %760 = vmatpush1.bf16.xpose.msra.mxu0 0
      %761 = vmatprep.subr.bf16.mxu0 0
      %762 = vmatpush1.bf16.xpose.msra.mxu0 0
      %763 = vmatprep.subr.bf16.mxu0 0
      %764 = vmatpush1.bf16.xpose.msra.mxu0 0
      %765 = vmatprep.subr.bf16.mxu0 0
      %766 = vmatpush1.bf16.xpose.msra.mxu0 0
      %767 = vmatprep.mubr.bf16.mxu0 0
      %768 = vmatmul.mubr.bf16.gmra.mrb[0].mxu0 %v689
      %v769 = vpop.f32.mrb[0].mxu0
      %v770 = vadd.f32 0.0, %v769
      %v771 = vpop.f32.mrb[0].mxu0
      %v772 = vpop.f32.mrb[0].mxu0
      %v773 = vadd.f32 0.0, %v772
      %v774 = vpop.f32.mrb[0].mxu0
      %775 = vdwg.mxu0
      %776 = vmatprep.subr.bf16.mxu0 0
      %777 = vmatpush1.bf16.xpose.msra.mxu0 %v692
      %778 = vmatprep.subr.bf16.mxu0 0
      %779 = vmatpush1.bf16.xpose.msra.mxu0 0
      %780 = vmatprep.subr.bf16.mxu0 0
      %781 = vmatpush1.bf16.xpose.msra.mxu0 0
      %782 = vmatprep.subr.bf16.mxu0 0
      %783 = vmatpush1.bf16.xpose.msra.mxu0 0
      %784 = vmatprep.subr.bf16.mxu0 0
      %785 = vmatpush1.bf16.xpose.msra.mxu0 0
      %786 = vmatprep.subr.bf16.mxu0 0
      %787 = vmatpush1.bf16.xpose.msra.mxu0 0
      %788 = vmatprep.subr.bf16.mxu0 0
      %789 = vmatpush1.bf16.xpose.msra.mxu0 0
      %790 = vmatprep.subr.bf16.mxu0 0
      %791 = vmatpush1.bf16.xpose.msra.mxu0 0
      %792 = vmatprep.subr.bf16.mxu0 0
      %793 = vmatpush1.bf16.xpose.msra.mxu0 0
      %794 = vmatprep.subr.bf16.mxu0 0
      %795 = vmatpush1.bf16.xpose.msra.mxu0 0
      %796 = vmatprep.subr.bf16.mxu0 0
      %797 = vmatpush1.bf16.xpose.msra.mxu0 0
      %798 = vmatprep.subr.bf16.mxu0 0
      %799 = vmatpush1.bf16.xpose.msra.mxu0 0
      %800 = vmatprep.subr.bf16.mxu0 0
      %801 = vmatpush1.bf16.xpose.msra.mxu0 0
      %802 = vmatprep.subr.bf16.mxu0 0
      %803 = vmatpush1.bf16.xpose.msra.mxu0 0
      %804 = vmatprep.subr.bf16.mxu0 0
      %805 = vmatpush1.bf16.xpose.msra.mxu0 0
      %806 = vmatprep.subr.bf16.mxu0 0
      %807 = vmatpush1.bf16.xpose.msra.mxu0 0
      %808 = vmatprep.mubr.bf16.mxu0 0
      %809 = vmatmul.mubr.bf16.gmra.mrb[0].mxu0 %v689
      %v810 = vpop.f32.mrb[0].mxu0
      %v811 = vadd.f32 0.0, %v810
      %v812 = vpop.f32.mrb[0].mxu0
      %v813 = vpop.f32.mrb[0].mxu0
      %v814 = vadd.f32 0.0, %v813
      %v815 = vpop.f32.mrb[0].mxu0
      %816 = vdwg.mxu0
      %817 = vmatprep.subr.bf16.mxu0 0
      %818 = vmatpush1.bf16.xpose.msra.mxu0 %v693
      %819 = vmatprep.subr.bf16.mxu0 0
      %820 = vmatpush1.bf16.xpose.msra.mxu0 0
      %821 = vmatprep.subr.bf16.mxu0 0
      %822 = vmatpush1.bf16.xpose.msra.mxu0 0
      %823 = vmatprep.subr.bf16.mxu0 0
      %824 = vmatpush1.bf16.xpose.msra.mxu0 0
      %825 = vmatprep.subr.bf16.mxu0 0
      %826 = vmatpush1.bf16.xpose.msra.mxu0 0
      %827 = vmatprep.subr.bf16.mxu0 0
      %828 = vmatpush1.bf16.xpose.msra.mxu0 0
      %829 = vmatprep.subr.bf16.mxu0 0
      %830 = vmatpush1.bf16.xpose.msra.mxu0 0
      %831 = vmatprep.subr.bf16.mxu0 0
      %832 = vmatpush1.bf16.xpose.msra.mxu0 0
      %833 = vmatprep.subr.bf16.mxu0 0
      %834 = vmatpush1.bf16.xpose.msra.mxu0 0
      %835 = vmatprep.subr.bf16.mxu0 0
      %836 = vmatpush1.bf16.xpose.msra.mxu0 0
      %837 = vmatprep.subr.bf16.mxu0 0
      %838 = vmatpush1.bf16.xpose.msra.mxu0 0
      %839 = vmatprep.subr.bf16.mxu0 0
      %840 = vmatpush1.bf16.xpose.msra.mxu0 0
      %841 = vmatprep.subr.bf16.mxu0 0
      %842 = vmatpush1.bf16.xpose.msra.mxu0 0
      %843 = vmatprep.subr.bf16.mxu0 0
      %844 = vmatpush1.bf16.xpose.msra.mxu0 0
      %845 = vmatprep.subr.bf16.mxu0 0
      %846 = vmatpush1.bf16.xpose.msra.mxu0 0
      %847 = vmatprep.subr.bf16.mxu0 0
      %848 = vmatpush1.bf16.xpose.msra.mxu0 0
      %849 = vmatprep.mubr.bf16.mxu0 0
      %850 = vmatmul.mubr.bf16.gmra.mrb[0].mxu0 %v689
      %v851 = vpop.f32.mrb[0].mxu0
      %v852 = vadd.f32 0.0, %v851
      %v853 = vpop.f32.mrb[0].mxu0
      %v854 = vpop.f32.mrb[0].mxu0
      %v855 = vadd.f32 0.0, %v854
      %v856 = vpop.f32.mrb[0].mxu0
      %857 = vdwg.mxu0
      %vm858 = vcmask 130048
      %v859 = vsel %vm858, %v729, -inf
      %860 = vmax.xlane.f32.xlu0 %v859
      %v861 = vpop.xlane.xlu0 %860
      %v862 = vsel %vm858, %v732, -inf
      %863 = vmax.xlane.f32.xlu0 %v862
      %v864 = vpop.xlane.xlu0 %863
      %v865 = vsel %vm858, %v770, -inf
      %866 = vmax.xlane.f32.xlu0 %v865
      %v867 = vpop.xlane.xlu0 %866
      %v868 = vsel %vm858, %v773, -inf
      %869 = vmax.xlane.f32.xlu0 %v868
      %v870 = vpop.xlane.xlu0 %869
      %v871 = vsel %vm858, %v811, -inf
      %872 = vmax.xlane.f32.xlu0 %v871
      %v873 = vpop.xlane.xlu0 %872
      %v874 = vsel %vm858, %v814, -inf
      %875 = vmax.xlane.f32.xlu0 %v874
      %v876 = vpop.xlane.xlu0 %875
      %v877 = vsel %vm858, %v852, -inf
      %878 = vmax.xlane.f32.xlu0 %v877
      %v879 = vpop.xlane.xlu0 %878
      %v880 = vsel %vm858, %v855, -inf
      %881 = vmax.xlane.f32.xlu0 %v880
      %v882 = vpop.xlane.xlu0 %881
      %v883 = vsub.f32 %v729, %v861
      %v884 = vsub.f32 %v732, %v864
      %v885 = vsub.f32 %v770, %v867
      %v886 = vsub.f32 %v773, %v870
      %v887 = vsub.f32 %v811, %v873
      %v888 = vsub.f32 %v814, %v876
      %v889 = vsub.f32 %v852, %v879
      %v890 = vsub.f32 %v855, %v882
      %v891 = vmul.f32 %v883, 1.442695
      %v892 = vpow.pop %v891
      %v893 = vmul.f32 %v884, 1.442695
      %v894 = vpow.pop %v893
      %v895 = vmul.f32 %v885, 1.442695
      %v896 = vpow.pop %v895
      %v897 = vmul.f32 %v886, 1.442695
      %v898 = vpow.pop %v897
      %v899 = vmul.f32 %v887, 1.442695
      %v900 = vpow.pop %v899
      %v901 = vmul.f32 %v888, 1.442695
      %v902 = vpow.pop %v901
      %v903 = vmul.f32 %v889, 1.442695
      %v904 = vpow.pop %v903
      %v905 = vmul.f32 %v890, 1.442695
      %v906 = vpow.pop %v905
      %v907 = vsel %vm858, %v892, 0.0
      %908 = vadd.xlane.f32.xlu0 %v907
      %v909 = vpop.xlane.xlu0 %908
      %v910 = vsel %vm858, %v894, 0.0
      %911 = vadd.xlane.f32.xlu0 %v910
      %v912 = vpop.xlane.xlu0 %911
      %v913 = vsel %vm858, %v896, 0.0
      %914 = vadd.xlane.f32.xlu0 %v913
      %v915 = vpop.xlane.xlu0 %914
      %v916 = vsel %vm858, %v898, 0.0
      %917 = vadd.xlane.f32.xlu0 %v916
      %v918 = vpop.xlane.xlu0 %917
      %v919 = vsel %vm858, %v900, 0.0
      %920 = vadd.xlane.f32.xlu0 %v919
      %v921 = vpop.xlane.xlu0 %920
      %v922 = vsel %vm858, %v902, 0.0
      %923 = vadd.xlane.f32.xlu0 %v922
      %v924 = vpop.xlane.xlu0 %923
      %v925 = vsel %vm858, %v904, 0.0
      %926 = vadd.xlane.f32.xlu0 %v925
      %v927 = vpop.xlane.xlu0 %926
      %v928 = vsel %vm858, %v906, 0.0
      %929 = vadd.xlane.f32.xlu0 %v928
      %v930 = vpop.xlane.xlu0 %929
      %v931 = vrcp.pop %v909
      %v932 = vrcp.pop %v912
      %v933 = vrcp.pop %v915
      %v934 = vrcp.pop %v918
      %v935 = vrcp.pop %v921
      %v936 = vrcp.pop %v924
      %v937 = vrcp.pop %v927
      %v938 = vrcp.pop %v930
      %v939 = vmul.f32 %v892, %v931
      %v940 = vmul.f32 %v894, %v932
      %v941 = vmul.f32 %v896, %v933
      %v942 = vmul.f32 %v898, %v934
      %v943 = vmul.f32 %v900, %v935
      %v944 = vmul.f32 %v902, %v936
      %v945 = vmul.f32 %v904, %v937
      %v946 = vmul.f32 %v906, %v938
      %v947 = vpack.c.bf16 %v940, %v939
      %v948 = vpack.c.bf16 %v942, %v941
      %v949 = vpack.c.bf16 %v944, %v943
      %v950 = vpack.c.bf16 %v946, %v945
      %v951 = vpack.c.bf16 %v660, %v657
      %v952 = vpack.c.bf16 %v668, %v665
      %v953 = vpack.c.bf16 %v676, %v673
      %v954 = vpack.c.bf16 %v684, %v681
      %v956 = vsel %vm858, %v947, 0
      %958 = vmatprep.subr.bf16.mxu0 0
      %959 = vmatpush1.bf16.msra.mxu0 %v951
      %960 = vmatprep.subr.bf16.mxu0 0
      %961 = vmatpush1.bf16.msra.mxu0 0
      %962 = vmatprep.subr.bf16.mxu0 0
      %963 = vmatpush1.bf16.msra.mxu0 0
      %964 = vmatprep.subr.bf16.mxu0 0
      %965 = vmatpush1.bf16.msra.mxu0 0
      %966 = vmatprep.subr.bf16.mxu0 0
      %967 = vmatpush1.bf16.msra.mxu0 0
      %968 = vmatprep.subr.bf16.mxu0 0
      %969 = vmatpush1.bf16.msra.mxu0 0
      %970 = vmatprep.subr.bf16.mxu0 0
      %971 = vmatpush1.bf16.msra.mxu0 0
      %972 = vmatprep.subr.bf16.mxu0 0
      %973 = vmatpush1.bf16.msra.mxu0 0
      %974 = vmatprep.subr.bf16.mxu0 0
      %975 = vmatpush1.bf16.msra.mxu0 0
      %976 = vmatprep.subr.bf16.mxu0 0
      %977 = vmatpush1.bf16.msra.mxu0 0
      %978 = vmatprep.subr.bf16.mxu0 0
      %979 = vmatpush1.bf16.msra.mxu0 0
      %980 = vmatprep.subr.bf16.mxu0 0
      %981 = vmatpush1.bf16.msra.mxu0 0
      %982 = vmatprep.subr.bf16.mxu0 0
      %983 = vmatpush1.bf16.msra.mxu0 0
      %984 = vmatprep.subr.bf16.mxu0 0
      %985 = vmatpush1.bf16.msra.mxu0 0
      %986 = vmatprep.subr.bf16.mxu0 0
      %987 = vmatpush1.bf16.msra.mxu0 0
      %988 = vmatprep.subr.bf16.mxu0 0
      %989 = vmatpush1.bf16.msra.mxu0 0
      %990 = vmatprep.mubr.bf16.mxu0 0
      %991 = vmatmul.mubr.bf16.gmra.mrb[0].mxu0 %v956
      %v992 = vpop.f32.mrb[0].mxu0
      %v993 = vadd.f32 0.0, %v992
      %v994 = vpop.f32.mrb[0].mxu0
      %v995 = vpop.f32.mrb[0].mxu0
      %v996 = vadd.f32 0.0, %v995
      %v997 = vpop.f32.mrb[0].mxu0
      %998 = vdwg.mxu0
      %v1000 = vsel %vm858, %v948, 0
      %1002 = vmatprep.subr.bf16.mxu0 0
      %1003 = vmatpush1.bf16.msra.mxu0 %v952
      %1004 = vmatprep.subr.bf16.mxu0 0
      %1005 = vmatpush1.bf16.msra.mxu0 0
      %1006 = vmatprep.subr.bf16.mxu0 0
      %1007 = vmatpush1.bf16.msra.mxu0 0
      %1008 = vmatprep.subr.bf16.mxu0 0
      %1009 = vmatpush1.bf16.msra.mxu0 0
      %1010 = vmatprep.subr.bf16.mxu0 0
      %1011 = vmatpush1.bf16.msra.mxu0 0
      %1012 = vmatprep.subr.bf16.mxu0 0
      %1013 = vmatpush1.bf16.msra.mxu0 0
      %1014 = vmatprep.subr.bf16.mxu0 0
      %1015 = vmatpush1.bf16.msra.mxu0 0
      %1016 = vmatprep.subr.bf16.mxu0 0
      %1017 = vmatpush1.bf16.msra.mxu0 0
      %1018 = vmatprep.subr.bf16.mxu0 0
      %1019 = vmatpush1.bf16.msra.mxu0 0
      %1020 = vmatprep.subr.bf16.mxu0 0
      %1021 = vmatpush1.bf16.msra.mxu0 0
      %1022 = vmatprep.subr.bf16.mxu0 0
      %1023 = vmatpush1.bf16.msra.mxu0 0
      %1024 = vmatprep.subr.bf16.mxu0 0
      %1025 = vmatpush1.bf16.msra.mxu0 0
      %1026 = vmatprep.subr.bf16.mxu0 0
      %1027 = vmatpush1.bf16.msra.mxu0 0
      %1028 = vmatprep.subr.bf16.mxu0 0
      %1029 = vmatpush1.bf16.msra.mxu0 0
      %1030 = vmatprep.subr.bf16.mxu0 0
      %1031 = vmatpush1.bf16.msra.mxu0 0
      %1032 = vmatprep.subr.bf16.mxu0 0
      %1033 = vmatpush1.bf16.msra.mxu0 0
      %1034 = vmatprep.mubr.bf16.mxu0 0
      %1035 = vmatmul.mubr.bf16.gmra.mrb[0].mxu0 %v1000
      %v1036 = vpop.f32.mrb[0].mxu0
      %v1037 = vadd.f32 0.0, %v1036
      %v1038 = vpop.f32.mrb[0].mxu0
      %v1039 = vpop.f32.mrb[0].mxu0
      %v1040 = vadd.f32 0.0, %v1039
      %v1041 = vpop.f32.mrb[0].mxu0
      %1042 = vdwg.mxu0
      %v1044 = vsel %vm858, %v949, 0
      %1046 = vmatprep.subr.bf16.mxu0 0
      %1047 = vmatpush1.bf16.msra.mxu0 %v953
      %1048 = vmatprep.subr.bf16.mxu0 0
      %1049 = vmatpush1.bf16.msra.mxu0 0
      %1050 = vmatprep.subr.bf16.mxu0 0
      %1051 = vmatpush1.bf16.msra.mxu0 0
      %1052 = vmatprep.subr.bf16.mxu0 0
      %1053 = vmatpush1.bf16.msra.mxu0 0
      %1054 = vmatprep.subr.bf16.mxu0 0
      %1055 = vmatpush1.bf16.msra.mxu0 0
      %1056 = vmatprep.subr.bf16.mxu0 0
      %1057 = vmatpush1.bf16.msra.mxu0 0
      %1058 = vmatprep.subr.bf16.mxu0 0
      %1059 = vmatpush1.bf16.msra.mxu0 0
      %1060 = vmatprep.subr.bf16.mxu0 0
      %1061 = vmatpush1.bf16.msra.mxu0 0
      %1062 = vmatprep.subr.bf16.mxu0 0
      %1063 = vmatpush1.bf16.msra.mxu0 0
      %1064 = vmatprep.subr.bf16.mxu0 0
      %1065 = vmatpush1.bf16.msra.mxu0 0
      %1066 = vmatprep.subr.bf16.mxu0 0
      %1067 = vmatpush1.bf16.msra.mxu0 0
      %1068 = vmatprep.subr.bf16.mxu0 0
      %1069 = vmatpush1.bf16.msra.mxu0 0
      %1070 = vmatprep.subr.bf16.mxu0 0
      %1071 = vmatpush1.bf16.msra.mxu0 0
      %1072 = vmatprep.subr.bf16.mxu0 0
      %1073 = vmatpush1.bf16.msra.mxu0 0
      %1074 = vmatprep.subr.bf16.mxu0 0
      %1075 = vmatpush1.bf16.msra.mxu0 0
      %1076 = vmatprep.subr.bf16.mxu0 0
      %1077 = vmatpush1.bf16.msra.mxu0 0
      %1078 = vmatprep.mubr.bf16.mxu0 0
      %1079 = vmatmul.mubr.bf16.gmra.mrb[0].mxu0 %v1044
      %v1080 = vpop.f32.mrb[0].mxu0
      %v1081 = vadd.f32 0.0, %v1080
      %v1082 = vpop.f32.mrb[0].mxu0
      %v1083 = vpop.f32.mrb[0].mxu0
      %v1084 = vadd.f32 0.0, %v1083
      %v1085 = vpop.f32.mrb[0].mxu0
      %1086 = vdwg.mxu0
      %v1088 = vsel %vm858, %v950, 0
      %1090 = vmatprep.subr.bf16.mxu0 0
      %1091 = vmatpush1.bf16.msra.mxu0 %v954
      %1092 = vmatprep.subr.bf16.mxu0 0
      %1093 = vmatpush1.bf16.msra.mxu0 0
      %1094 = vmatprep.subr.bf16.mxu0 0
      %1095 = vmatpush1.bf16.msra.mxu0 0
      %1096 = vmatprep.subr.bf16.mxu0 0
      %1097 = vmatpush1.bf16.msra.mxu0 0
      %1098 = vmatprep.subr.bf16.mxu0 0
      %1099 = vmatpush1.bf16.msra.mxu0 0
      %1100 = vmatprep.subr.bf16.mxu0 0
      %1101 = vmatpush1.bf16.msra.mxu0 0
      %1102 = vmatprep.subr.bf16.mxu0 0
      %1103 = vmatpush1.bf16.msra.mxu0 0
      %1104 = vmatprep.subr.bf16.mxu0 0
      %1105 = vmatpush1.bf16.msra.mxu0 0
      %1106 = vmatprep.subr.bf16.mxu0 0
      %1107 = vmatpush1.bf16.msra.mxu0 0
      %1108 = vmatprep.subr.bf16.mxu0 0
      %1109 = vmatpush1.bf16.msra.mxu0 0
      %1110 = vmatprep.subr.bf16.mxu0 0
      %1111 = vmatpush1.bf16.msra.mxu0 0
      %1112 = vmatprep.subr.bf16.mxu0 0
      %1113 = vmatpush1.bf16.msra.mxu0 0
      %1114 = vmatprep.subr.bf16.mxu0 0
      %1115 = vmatpush1.bf16.msra.mxu0 0
      %1116 = vmatprep.subr.bf16.mxu0 0
      %1117 = vmatpush1.bf16.msra.mxu0 0
      %1118 = vmatprep.subr.bf16.mxu0 0
      %1119 = vmatpush1.bf16.msra.mxu0 0
      %1120 = vmatprep.subr.bf16.mxu0 0
      %1121 = vmatpush1.bf16.msra.mxu0 0
      %1122 = vmatprep.mubr.bf16.mxu0 0
      %1123 = vmatmul.mubr.bf16.gmra.mrb[0].mxu0 %v1088
      %v1124 = vpop.f32.mrb[0].mxu0
      %v1125 = vadd.f32 0.0, %v1124
      %v1126 = vpop.f32.mrb[0].mxu0
      %v1127 = vpop.f32.mrb[0].mxu0
      %v1128 = vadd.f32 0.0, %v1127
      %v1129 = vpop.f32.mrb[0].mxu0
      %1130 = vdwg.mxu0
      %v1131 = vpack.c.bf16 %v996, %v993
      %v1132 = vpack.c.bf16 %v1040, %v1037
      %v1133 = vpack.c.bf16 %v1084, %v1081
      %v1134 = vpack.c.bf16 %v1128, %v1125
      %v1135 = vlaneseq
      %v1136 = vshrl.u32 %v1135, 7
      %v1137 = vsub.s32 0, %v1136
      %v1138 = vrot.slane %v417, %v1137
      %v1155 = vunpack.c.l.b16 %v399
      %v1156 = vunpack.c.l.b16 %v400
      %v1157 = vunpack.c.l.b16 %v401
      %v1158 = vunpack.c.l.b16 %v402
      %v1159 = vunpack.c.l.b16 %v403
      %v1160 = vunpack.c.l.b16 %v404
      %v1161 = vunpack.c.l.b16 %v405
      %v1162 = vunpack.c.l.b16 %v406
      %v1163 = vunpack.c.l.b16 %v407
      %v1164 = vunpack.c.l.b16 %v408
      %v1165 = vunpack.c.l.b16 %v409
      %v1166 = vunpack.c.l.b16 %v410
      %v1167 = vunpack.c.l.b16 %v411
      %v1168 = vunpack.c.l.b16 %v412
      %v1169 = vunpack.c.l.b16 %v413
      %v1170 = vunpack.c.l.b16 %v414
      %v1171 = vpack.c.b16 %v1156, %v1155
      %v1172 = vpack.c.b16 %v1158, %v1157
      %v1173 = vpack.c.b16 %v1160, %v1159
      %v1174 = vpack.c.b16 %v1162, %v1161
      %v1175 = vpack.c.b16 %v1164, %v1163
      %v1176 = vpack.c.b16 %v1166, %v1165
      %v1177 = vpack.c.b16 %v1168, %v1167
      %v1178 = vpack.c.b16 %v1170, %v1169
      %1187 = vmatprep.subr.bf16.mxu0 0
      %1188 = vmatpush1.bf16.msra.mxu0 %v1171
      %1189 = vmatprep.subr.bf16.mxu0 0
      %1190 = vmatpush1.bf16.msra.mxu0 %v1172
      %1191 = vmatprep.subr.bf16.mxu0 0
      %1192 = vmatpush1.bf16.msra.mxu0 %v1173
      %1193 = vmatprep.subr.bf16.mxu0 0
      %1194 = vmatpush1.bf16.msra.mxu0 %v1174
      %1195 = vmatprep.subr.bf16.mxu0 0
      %1196 = vmatpush1.bf16.msra.mxu0 %v1175
      %1197 = vmatprep.subr.bf16.mxu0 0
      %1198 = vmatpush1.bf16.msra.mxu0 %v1176
      %1199 = vmatprep.subr.bf16.mxu0 0
      %1200 = vmatpush1.bf16.msra.mxu0 %v1177
      %1201 = vmatprep.subr.bf16.mxu0 0
      %1202 = vmatpush1.bf16.msra.mxu0 %v1178
      %1203 = vmatprep.subr.bf16.mxu0 0
      %1204 = vmatpush1.bf16.msra.mxu0 0
      %1205 = vmatprep.subr.bf16.mxu0 0
      %1206 = vmatpush1.bf16.msra.mxu0 0
      %1207 = vmatprep.subr.bf16.mxu0 0
      %1208 = vmatpush1.bf16.msra.mxu0 0
      %1209 = vmatprep.subr.bf16.mxu0 0
      %1210 = vmatpush1.bf16.msra.mxu0 0
      %1211 = vmatprep.subr.bf16.mxu0 0
      %1212 = vmatpush1.bf16.msra.mxu0 0
      %1213 = vmatprep.subr.bf16.mxu0 0
      %1214 = vmatpush1.bf16.msra.mxu0 0
      %1215 = vmatprep.subr.bf16.mxu0 0
      %1216 = vmatpush1.bf16.msra.mxu0 0
      %1217 = vmatprep.subr.bf16.mxu0 0
      %1218 = vmatpush1.bf16.msra.mxu0 0
      %1219 = vmatprep.mubr.bf16.mxu0 0
      %1220 = vmatmul.mubr.bf16.gmra.mrb[0].mxu0 %v1131
      %v1221 = vpop.f32.mrb[0].mxu0
      %v1222 = vadd.f32 %v1138, %v1221
      %v1223 = vpop.f32.mrb[0].mxu0
      %v1224 = vpop.f32.mrb[0].mxu0
      %v1225 = vadd.f32 %v1138, %v1224
      %v1226 = vpop.f32.mrb[0].mxu0
      %1227 = vmatprep.mubr.bf16.mxu0 0
      %1228 = vmatmul.mubr.bf16.gmra.mrb[0].mxu0 %v1132
      %v1229 = vpop.f32.mrb[0].mxu0
      %v1230 = vadd.f32 %v1138, %v1229
      %v1231 = vpop.f32.mrb[0].mxu0
      %v1232 = vpop.f32.mrb[0].mxu0
      %v1233 = vadd.f32 %v1138, %v1232
      %v1234 = vpop.f32.mrb[0].mxu0
      %1235 = vmatprep.mubr.bf16.mxu0 0
      %1236 = vmatmul.mubr.bf16.gmra.mrb[0].mxu0 %v1133
      %v1237 = vpop.f32.mrb[0].mxu0
      %v1238 = vadd.f32 %v1138, %v1237
      %v1239 = vpop.f32.mrb[0].mxu0
      %v1240 = vpop.f32.mrb[0].mxu0
      %v1241 = vadd.f32 %v1138, %v1240
      %v1242 = vpop.f32.mrb[0].mxu0
      %1243 = vmatprep.mubr.bf16.mxu0 0
      %1244 = vmatmul.mubr.bf16.gmra.mrb[0].mxu0 %v1134
      %v1245 = vpop.f32.mrb[0].mxu0
      %v1246 = vadd.f32 %v1138, %v1245
      %v1247 = vpop.f32.mrb[0].mxu0
      %v1248 = vpop.f32.mrb[0].mxu0
      %v1249 = vadd.f32 %v1138, %v1248
      %v1250 = vpop.f32.mrb[0].mxu0
      %1251 = vdwg.mxu0
      %1252 = vadd.xlane.f32.xlu0 %v1222
      %v1253 = vpop.xlane.xlu0 %1252
      %1254 = vadd.xlane.f32.xlu0 %v1225
      %v1255 = vpop.xlane.xlu0 %1254
      %1256 = vadd.xlane.f32.xlu0 %v1230
      %v1257 = vpop.xlane.xlu0 %1256
      %1258 = vadd.xlane.f32.xlu0 %v1233
      %v1259 = vpop.xlane.xlu0 %1258
      %1260 = vadd.xlane.f32.xlu0 %v1238
      %v1261 = vpop.xlane.xlu0 %1260
      %1262 = vadd.xlane.f32.xlu0 %v1241
      %v1263 = vpop.xlane.xlu0 %1262
      %1264 = vadd.xlane.f32.xlu0 %v1246
      %v1265 = vpop.xlane.xlu0 %1264
      %1266 = vadd.xlane.f32.xlu0 %v1249
      %v1267 = vpop.xlane.xlu0 %1266
      %v1268 = vrcp.pop 128.0
      %v1269 = vmul.f32 %v1253, %v1268
      %v1270 = vmul.f32 %v1255, %v1268
      %v1271 = vmul.f32 %v1257, %v1268
      %v1272 = vmul.f32 %v1259, %v1268
      %v1273 = vmul.f32 %v1261, %v1268
      %v1274 = vmul.f32 %v1263, %v1268
      %v1275 = vmul.f32 %v1265, %v1268
      %v1276 = vmul.f32 %v1267, %v1268
      %v1277 = vsub.f32 %v1222, %v1269
      %v1278 = vsub.f32 %v1225, %v1270
      %v1279 = vsub.f32 %v1230, %v1271
      %v1280 = vsub.f32 %v1233, %v1272
      %v1281 = vsub.f32 %v1238, %v1273
      %v1282 = vsub.f32 %v1241, %v1274
      %v1283 = vsub.f32 %v1246, %v1275
      %v1284 = vsub.f32 %v1249, %v1276
      %v1285 = vmul.f32 %v1277, %v1277
      %v1286 = vmul.f32 %v1278, %v1278
      %v1287 = vmul.f32 %v1279, %v1279
      %v1288 = vmul.f32 %v1280, %v1280
      %v1289 = vmul.f32 %v1281, %v1281
      %v1290 = vmul.f32 %v1282, %v1282
      %v1291 = vmul.f32 %v1283, %v1283
      %v1292 = vmul.f32 %v1284, %v1284
      %1293 = vadd.xlane.f32.xlu0 %v1285
      %v1294 = vpop.xlane.xlu0 %1293
      %1295 = vadd.xlane.f32.xlu0 %v1286
      %v1296 = vpop.xlane.xlu0 %1295
      %1297 = vadd.xlane.f32.xlu0 %v1287
      %v1298 = vpop.xlane.xlu0 %1297
      %1299 = vadd.xlane.f32.xlu0 %v1288
      %v1300 = vpop.xlane.xlu0 %1299
      %1301 = vadd.xlane.f32.xlu0 %v1289
      %v1302 = vpop.xlane.xlu0 %1301
      %1303 = vadd.xlane.f32.xlu0 %v1290
      %v1304 = vpop.xlane.xlu0 %1303
      %1305 = vadd.xlane.f32.xlu0 %v1291
      %v1306 = vpop.xlane.xlu0 %1305
      %1307 = vadd.xlane.f32.xlu0 %v1292
      %v1308 = vpop.xlane.xlu0 %1307
      %v1309 = vmul.f32 %v1294, %v1268
      %v1310 = vmul.f32 %v1296, %v1268
      %v1311 = vmul.f32 %v1298, %v1268
      %v1312 = vmul.f32 %v1300, %v1268
      %v1313 = vmul.f32 %v1302, %v1268
      %v1314 = vmul.f32 %v1304, %v1268
      %v1315 = vmul.f32 %v1306, %v1268
      %v1316 = vmul.f32 %v1308, %v1268
      %v1317 = vadd.f32 %v1309, 1e-05
      %v1318 = vadd.f32 %v1310, 1e-05
      %v1319 = vadd.f32 %v1311, 1e-05
      %v1320 = vadd.f32 %v1312, 1e-05
      %v1321 = vadd.f32 %v1313, 1e-05
      %v1322 = vadd.f32 %v1314, 1e-05
      %v1323 = vadd.f32 %v1315, 1e-05
      %v1324 = vadd.f32 %v1316, 1e-05
      %v1325 = vrsqrt.pop %v1317
      %v1326 = vrsqrt.pop %v1318
      %v1327 = vrsqrt.pop %v1319
      %v1328 = vrsqrt.pop %v1320
      %v1329 = vrsqrt.pop %v1321
      %v1330 = vrsqrt.pop %v1322
      %v1331 = vrsqrt.pop %v1323
      %v1332 = vrsqrt.pop %v1324
      %v1333 = vmul.f32 %v1277, %v1325
      %v1334 = vmul.f32 %v1278, %v1326
      %v1335 = vmul.f32 %v1279, %v1327
      %v1336 = vmul.f32 %v1280, %v1328
      %v1337 = vmul.f32 %v1281, %v1329
      %v1338 = vmul.f32 %v1282, %v1330
      %v1339 = vmul.f32 %v1283, %v1331
      %v1340 = vmul.f32 %v1284, %v1332
      %v1341 = vlaneseq
      %v1342 = vshrl.u32 %v1341, 7
      %v1343 = vsub.s32 0, %v1342
      %v1344 = vrot.slane %v419, %v1343
      %v1345 = vmul.f32 %v1333, %v1344
      %v1346 = vmul.f32 %v1334, %v1344
      %v1347 = vmul.f32 %v1335, %v1344
      %v1348 = vmul.f32 %v1336, %v1344
      %v1349 = vmul.f32 %v1337, %v1344
      %v1350 = vmul.f32 %v1338, %v1344
      %v1351 = vmul.f32 %v1339, %v1344
      %v1352 = vmul.f32 %v1340, %v1344
      %v1353 = vlaneseq
      %v1354 = vshrl.u32 %v1353, 7
      %v1355 = vsub.s32 0, %v1354
      %v1356 = vrot.slane %v420, %v1355
      %v1357 = vadd.f32 %v1345, %v1356
      %v1358 = vadd.f32 %v1346, %v1356
      %v1359 = vadd.f32 %v1347, %v1356
      %v1360 = vadd.f32 %v1348, %v1356
      %v1361 = vadd.f32 %v1349, %v1356
      %v1362 = vadd.f32 %v1350, %v1356
      %v1363 = vadd.f32 %v1351, %v1356
      %v1364 = vadd.f32 %v1352, %v1356
      %v1365 = vld [vmem:[%s1] sm:$0xff]
      %v1366 = vld [vmem:[%s1 + $0x8] sm:$0xff]
      %v1367 = vadd.f32 %v1357, %v1365
      %v1368 = vadd.f32 %v1358, %v1366
      %v1369 = vadd.f32 %v1359, %v1365
      %v1370 = vadd.f32 %v1360, %v1366
      %v1371 = vadd.f32 %v1361, %v1365
      %v1372 = vadd.f32 %v1362, %v1366
      %v1373 = vadd.f32 %v1363, %v1365
      %v1374 = vadd.f32 %v1364, %v1366
      %v1375 = vld [vmem:[%s6] sm:$0xf]
      %v1376 = vld [vmem:[%s6 + $0x4] sm:$0xf]
      %v1377 = vld [vmem:[%s6 + $0x8] sm:$0xf]
      %v1378 = vld [vmem:[%s6 + $0xc] sm:$0xf]
      %v1379 = vld [vmem:[%s6 + $0x10] sm:$0xf]
      %v1380 = vld [vmem:[%s6 + $0x14] sm:$0xf]
      %v1381 = vld [vmem:[%s6 + $0x18] sm:$0xf]
      %v1382 = vld [vmem:[%s6 + $0x1c] sm:$0xf]
      %v1383 = vld [vmem:[%s6 + $0x20] sm:$0xf]
      %v1384 = vld [vmem:[%s6 + $0x24] sm:$0xf]
      %v1385 = vld [vmem:[%s6 + $0x28] sm:$0xf]
      %v1386 = vld [vmem:[%s6 + $0x2c] sm:$0xf]
      %v1387 = vld [vmem:[%s6 + $0x30] sm:$0xf]
      %v1388 = vld [vmem:[%s6 + $0x34] sm:$0xf]
      %v1389 = vld [vmem:[%s6 + $0x38] sm:$0xf]
      %v1390 = vld [vmem:[%s6 + $0x3c] sm:$0xf]
      %v1391 = vld [vmem:[%s7] sm:$0x1]
      %v1392 = vpack.c.bf16 %v1368, %v1367
      %v1393 = vpack.c.bf16 %v1370, %v1369
      %v1394 = vpack.c.bf16 %v1372, %v1371
      %v1395 = vpack.c.bf16 %v1374, %v1373
      %v1397 = vlaneseq
      %v1398 = vshrl.u32 %v1397, 7
      %v1399 = vsub.s32 0, %v1398
      %v1400 = vrot.slane %v1391, %v1399
      %v1418 = vunpack.c.l.b16 %v1375
      %v1419 = vunpack.c.l.b16 %v1376
      %v1420 = vunpack.c.l.b16 %v1377
      %v1421 = vunpack.c.l.b16 %v1378
      %v1422 = vunpack.c.l.b16 %v1379
      %v1423 = vunpack.c.l.b16 %v1380
      %v1424 = vunpack.c.l.b16 %v1381
      %v1425 = vunpack.c.l.b16 %v1382
      %v1426 = vunpack.c.l.b16 %v1383
      %v1427 = vunpack.c.l.b16 %v1384
      %v1428 = vunpack.c.l.b16 %v1385
      %v1429 = vunpack.c.l.b16 %v1386
      %v1430 = vunpack.c.l.b16 %v1387
      %v1431 = vunpack.c.l.b16 %v1388
      %v1432 = vunpack.c.l.b16 %v1389
      %v1433 = vunpack.c.l.b16 %v1390
      %v1434 = vpack.c.b16 %v1419, %v1418
      %v1435 = vpack.c.b16 %v1421, %v1420
      %v1436 = vpack.c.b16 %v1423, %v1422
      %v1437 = vpack.c.b16 %v1425, %v1424
      %v1438 = vpack.c.b16 %v1427, %v1426
      %v1439 = vpack.c.b16 %v1429, %v1428
      %v1440 = vpack.c.b16 %v1431, %v1430
      %v1441 = vpack.c.b16 %v1433, %v1432
      %1450 = vmatprep.subr.bf16.mxu0 0
      %1451 = vmatpush1.bf16.msra.mxu0 %v1434
      %1452 = vmatprep.subr.bf16.mxu0 0
      %1453 = vmatpush1.bf16.msra.mxu0 %v1435
      %1454 = vmatprep.subr.bf16.mxu0 0
      %1455 = vmatpush1.bf16.msra.mxu0 %v1436
      %1456 = vmatprep.subr.bf16.mxu0 0
      %1457 = vmatpush1.bf16.msra.mxu0 %v1437
      %1458 = vmatprep.subr.bf16.mxu0 0
      %1459 = vmatpush1.bf16.msra.mxu0 %v1438
      %1460 = vmatprep.subr.bf16.mxu0 0
      %1461 = vmatpush1.bf16.msra.mxu0 %v1439
      %1462 = vmatprep.subr.bf16.mxu0 0
      %1463 = vmatpush1.bf16.msra.mxu0 %v1440
      %1464 = vmatprep.subr.bf16.mxu0 0
      %1465 = vmatpush1.bf16.msra.mxu0 %v1441
      %1466 = vmatprep.subr.bf16.mxu0 0
      %1467 = vmatpush1.bf16.msra.mxu0 0
      %1468 = vmatprep.subr.bf16.mxu0 0
      %1469 = vmatpush1.bf16.msra.mxu0 0
      %1470 = vmatprep.subr.bf16.mxu0 0
      %1471 = vmatpush1.bf16.msra.mxu0 0
      %1472 = vmatprep.subr.bf16.mxu0 0
      %1473 = vmatpush1.bf16.msra.mxu0 0
      %1474 = vmatprep.subr.bf16.mxu0 0
      %1475 = vmatpush1.bf16.msra.mxu0 0
      %1476 = vmatprep.subr.bf16.mxu0 0
      %1477 = vmatpush1.bf16.msra.mxu0 0
      %1478 = vmatprep.subr.bf16.mxu0 0
      %1479 = vmatpush1.bf16.msra.mxu0 0
      %1480 = vmatprep.subr.bf16.mxu0 0
      %1481 = vmatpush1.bf16.msra.mxu0 0
      %1482 = vmatprep.mubr.bf16.mxu0 0
      %1483 = vmatmul.mubr.bf16.gmra.mrb[0].mxu0 %v1392
      %v1484 = vpop.f32.mrb[0].mxu0
      %v1485 = vadd.f32 %v1400, %v1484
      %v1486 = vpop.f32.mrb[0].mxu0
      %v1487 = vpop.f32.mrb[0].mxu0
      %v1488 = vadd.f32 %v1400, %v1487
      %v1489 = vpop.f32.mrb[0].mxu0
      %1490 = vmatprep.mubr.bf16.mxu0 0
      %1491 = vmatmul.mubr.bf16.gmra.mrb[0].mxu0 %v1393
      %v1492 = vpop.f32.mrb[0].mxu0
      %v1493 = vadd.f32 %v1400, %v1492
      %v1494 = vpop.f32.mrb[0].mxu0
      %v1495 = vpop.f32.mrb[0].mxu0
      %v1496 = vadd.f32 %v1400, %v1495
      %v1497 = vpop.f32.mrb[0].mxu0
      %1498 = vmatprep.mubr.bf16.mxu0 0
      %1499 = vmatmul.mubr.bf16.gmra.mrb[0].mxu0 %v1394
      %v1500 = vpop.f32.mrb[0].mxu0
      %v1501 = vadd.f32 %v1400, %v1500
      %v1502 = vpop.f32.mrb[0].mxu0
      %v1503 = vpop.f32.mrb[0].mxu0
      %v1504 = vadd.f32 %v1400, %v1503
      %v1505 = vpop.f32.mrb[0].mxu0
      %1506 = vmatprep.mubr.bf16.mxu0 0
      %1507 = vmatmul.mubr.bf16.gmra.mrb[0].mxu0 %v1395
      %v1508 = vpop.f32.mrb[0].mxu0
      %v1509 = vadd.f32 %v1400, %v1508
      %v1510 = vpop.f32.mrb[0].mxu0
      %v1511 = vpop.f32.mrb[0].mxu0
      %v1512 = vadd.f32 %v1400, %v1511
      %v1513 = vpop.f32.mrb[0].mxu0
      %1514 = vdwg.mxu0
      %v1515 = vmul.f32 %v1485, 0.5
      %v1516 = vmul.f32 %v1488, 0.5
      %v1517 = vmul.f32 %v1493, 0.5
      %v1518 = vmul.f32 %v1496, 0.5
      %v1519 = vmul.f32 %v1501, 0.5
      %v1520 = vmul.f32 %v1504, 0.5
      %v1521 = vmul.f32 %v1509, 0.5
      %v1522 = vmul.f32 %v1512, 0.5
      %v1523 = vmul.f32 %v1485, 0.70710677
      %v1524 = vmul.f32 %v1488, 0.70710677
      %v1525 = vmul.f32 %v1493, 0.70710677
      %v1526 = vmul.f32 %v1496, 0.70710677
      %v1527 = vmul.f32 %v1501, 0.70710677
      %v1528 = vmul.f32 %v1504, 0.70710677
      %v1529 = vmul.f32 %v1509, 0.70710677
      %v1530 = vmul.f32 %v1512, 0.70710677
      %v1531 = verf.f32.pop %v1523
      %v1532 = verf.f32.pop %v1524
      %v1533 = verf.f32.pop %v1525
      %v1534 = verf.f32.pop %v1526
      %v1535 = verf.f32.pop %v1527
      %v1536 = verf.f32.pop %v1528
      %v1537 = verf.f32.pop %v1529
      %v1538 = verf.f32.pop %v1530
      %v1539 = vadd.f32 %v1531, 1.0
      %v1540 = vadd.f32 %v1532, 1.0
      %v1541 = vadd.f32 %v1533, 1.0
      %v1542 = vadd.f32 %v1534, 1.0
      %v1543 = vadd.f32 %v1535, 1.0
      %v1544 = vadd.f32 %v1536, 1.0
      %v1545 = vadd.f32 %v1537, 1.0
      %v1546 = vadd.f32 %v1538, 1.0
      %v1547 = vmul.f32 %v1515, %v1539
      %v1548 = vmul.f32 %v1516, %v1540
      %v1549 = vmul.f32 %v1517, %v1541
      %v1550 = vmul.f32 %v1518, %v1542
      %v1551 = vmul.f32 %v1519, %v1543
      %v1552 = vmul.f32 %v1520, %v1544
      %v1553 = vmul.f32 %v1521, %v1545
      %v1554 = vmul.f32 %v1522, %v1546
      %v1555 = vld [vmem:[%s8] sm:$0xf]
      %v1556 = vld [vmem:[%s8 + $0x4] sm:$0xf]
      %v1557 = vld [vmem:[%s8 + $0x8] sm:$0xf]
      %v1558 = vld [vmem:[%s8 + $0xc] sm:$0xf]
      %v1559 = vld [vmem:[%s8 + $0x10] sm:$0xf]
      %v1560 = vld [vmem:[%s8 + $0x14] sm:$0xf]
      %v1561 = vld [vmem:[%s8 + $0x18] sm:$0xf]
      %v1562 = vld [vmem:[%s8 + $0x1c] sm:$0xf]
      %v1563 = vld [vmem:[%s8 + $0x20] sm:$0xf]
      %v1564 = vld [vmem:[%s8 + $0x24] sm:$0xf]
      %v1565 = vld [vmem:[%s8 + $0x28] sm:$0xf]
      %v1566 = vld [vmem:[%s8 + $0x2c] sm:$0xf]
      %v1567 = vld [vmem:[%s8 + $0x30] sm:$0xf]
      %v1568 = vld [vmem:[%s8 + $0x34] sm:$0xf]
      %v1569 = vld [vmem:[%s8 + $0x38] sm:$0xf]
      %v1570 = vld [vmem:[%s8 + $0x3c] sm:$0xf]
      %v1571 = vpack.c.bf16 %v1548, %v1547
      %v1572 = vpack.c.bf16 %v1550, %v1549
      %v1573 = vpack.c.bf16 %v1552, %v1551
      %v1574 = vpack.c.bf16 %v1554, %v1553
      %v1575 = vlaneseq
      %v1576 = vshrl.u32 %v1575, 7
      %v1577 = vsub.s32 0, %v1576
      %v1578 = vrot.slane %v418, %v1577
      %v1595 = vunpack.c.l.b16 %v1555
      %v1596 = vunpack.c.l.b16 %v1556
      %v1597 = vunpack.c.l.b16 %v1557
      %v1598 = vunpack.c.l.b16 %v1558
      %v1599 = vunpack.c.l.b16 %v1559
      %v1600 = vunpack.c.l.b16 %v1560
      %v1601 = vunpack.c.l.b16 %v1561
      %v1602 = vunpack.c.l.b16 %v1562
      %v1603 = vunpack.c.l.b16 %v1563
      %v1604 = vunpack.c.l.b16 %v1564
      %v1605 = vunpack.c.l.b16 %v1565
      %v1606 = vunpack.c.l.b16 %v1566
      %v1607 = vunpack.c.l.b16 %v1567
      %v1608 = vunpack.c.l.b16 %v1568
      %v1609 = vunpack.c.l.b16 %v1569
      %v1610 = vunpack.c.l.b16 %v1570
      %v1611 = vpack.c.b16 %v1596, %v1595
      %v1612 = vpack.c.b16 %v1598, %v1597
      %v1613 = vpack.c.b16 %v1600, %v1599
      %v1614 = vpack.c.b16 %v1602, %v1601
      %v1615 = vpack.c.b16 %v1604, %v1603
      %v1616 = vpack.c.b16 %v1606, %v1605
      %v1617 = vpack.c.b16 %v1608, %v1607
      %v1618 = vpack.c.b16 %v1610, %v1609
      %1627 = vmatprep.subr.bf16.mxu0 0
      %1628 = vmatpush1.bf16.msra.mxu0 %v1611
      %1629 = vmatprep.subr.bf16.mxu0 0
      %1630 = vmatpush1.bf16.msra.mxu0 %v1612
      %1631 = vmatprep.subr.bf16.mxu0 0
      %1632 = vmatpush1.bf16.msra.mxu0 %v1613
      %1633 = vmatprep.subr.bf16.mxu0 0
      %1634 = vmatpush1.bf16.msra.mxu0 %v1614
      %1635 = vmatprep.subr.bf16.mxu0 0
      %1636 = vmatpush1.bf16.msra.mxu0 %v1615
      %1637 = vmatprep.subr.bf16.mxu0 0
      %1638 = vmatpush1.bf16.msra.mxu0 %v1616
      %1639 = vmatprep.subr.bf16.mxu0 0
      %1640 = vmatpush1.bf16.msra.mxu0 %v1617
      %1641 = vmatprep.subr.bf16.mxu0 0
      %1642 = vmatpush1.bf16.msra.mxu0 %v1618
      %1643 = vmatprep.subr.bf16.mxu0 0
      %1644 = vmatpush1.bf16.msra.mxu0 0
      %1645 = vmatprep.subr.bf16.mxu0 0
      %1646 = vmatpush1.bf16.msra.mxu0 0
      %1647 = vmatprep.subr.bf16.mxu0 0
      %1648 = vmatpush1.bf16.msra.mxu0 0
      %1649 = vmatprep.subr.bf16.mxu0 0
      %1650 = vmatpush1.bf16.msra.mxu0 0
      %1651 = vmatprep.subr.bf16.mxu0 0
      %1652 = vmatpush1.bf16.msra.mxu0 0
      %1653 = vmatprep.subr.bf16.mxu0 0
      %1654 = vmatpush1.bf16.msra.mxu0 0
      %1655 = vmatprep.subr.bf16.mxu0 0
      %1656 = vmatpush1.bf16.msra.mxu0 0
      %1657 = vmatprep.subr.bf16.mxu0 0
      %1658 = vmatpush1.bf16.msra.mxu0 0
      %1659 = vmatprep.mubr.bf16.mxu0 0
      %1660 = vmatmul.mubr.bf16.gmra.mrb[0].mxu0 %v1571
      %v1661 = vpop.f32.mrb[0].mxu0
      %v1662 = vadd.f32 %v1578, %v1661
      %v1663 = vpop.f32.mrb[0].mxu0
      %v1664 = vpop.f32.mrb[0].mxu0
      %v1665 = vadd.f32 %v1578, %v1664
      %v1666 = vpop.f32.mrb[0].mxu0
      %1667 = vmatprep.mubr.bf16.mxu0 0
      %1668 = vmatmul.mubr.bf16.gmra.mrb[0].mxu0 %v1572
      %v1669 = vpop.f32.mrb[0].mxu0
      %v1670 = vadd.f32 %v1578, %v1669
      %v1671 = vpop.f32.mrb[0].mxu0
      %v1672 = vpop.f32.mrb[0].mxu0
      %v1673 = vadd.f32 %v1578, %v1672
      %v1674 = vpop.f32.mrb[0].mxu0
      %1675 = vmatprep.mubr.bf16.mxu0 0
      %1676 = vmatmul.mubr.bf16.gmra.mrb[0].mxu0 %v1573
      %v1677 = vpop.f32.mrb[0].mxu0
      %v1678 = vadd.f32 %v1578, %v1677
      %v1679 = vpop.f32.mrb[0].mxu0
      %v1680 = vpop.f32.mrb[0].mxu0
      %v1681 = vadd.f32 %v1578, %v1680
      %v1682 = vpop.f32.mrb[0].mxu0
      %1683 = vmatprep.mubr.bf16.mxu0 0
      %1684 = vmatmul.mubr.bf16.gmra.mrb[0].mxu0 %v1574
      %v1685 = vpop.f32.mrb[0].mxu0
      %v1686 = vadd.f32 %v1578, %v1685
      %v1687 = vpop.f32.mrb[0].mxu0
      %v1688 = vpop.f32.mrb[0].mxu0
      %v1689 = vadd.f32 %v1578, %v1688
      %v1690 = vpop.f32.mrb[0].mxu0
      %1691 = vdwg.mxu0
      %1692 = vadd.xlane.f32.xlu0 %v1662
      %v1693 = vpop.xlane.xlu0 %1692
      %1694 = vadd.xlane.f32.xlu0 %v1665
      %v1695 = vpop.xlane.xlu0 %1694
      %1696 = vadd.xlane.f32.xlu0 %v1670
      %v1697 = vpop.xlane.xlu0 %1696
      %1698 = vadd.xlane.f32.xlu0 %v1673
      %v1699 = vpop.xlane.xlu0 %1698
      %1700 = vadd.xlane.f32.xlu0 %v1678
      %v1701 = vpop.xlane.xlu0 %1700
      %1702 = vadd.xlane.f32.xlu0 %v1681
      %v1703 = vpop.xlane.xlu0 %1702
      %1704 = vadd.xlane.f32.xlu0 %v1686
      %v1705 = vpop.xlane.xlu0 %1704
      %1706 = vadd.xlane.f32.xlu0 %v1689
      %v1707 = vpop.xlane.xlu0 %1706
      %v1708 = vmul.f32 %v1693, %v1268
      %v1709 = vmul.f32 %v1695, %v1268
      %v1710 = vmul.f32 %v1697, %v1268
      %v1711 = vmul.f32 %v1699, %v1268
      %v1712 = vmul.f32 %v1701, %v1268
      %v1713 = vmul.f32 %v1703, %v1268
      %v1714 = vmul.f32 %v1705, %v1268
      %v1715 = vmul.f32 %v1707, %v1268
      %v1716 = vsub.f32 %v1662, %v1708
      %v1717 = vsub.f32 %v1665, %v1709
      %v1718 = vsub.f32 %v1670, %v1710
      %v1719 = vsub.f32 %v1673, %v1711
      %v1720 = vsub.f32 %v1678, %v1712
      %v1721 = vsub.f32 %v1681, %v1713
      %v1722 = vsub.f32 %v1686, %v1714
      %v1723 = vsub.f32 %v1689, %v1715
      %v1724 = vmul.f32 %v1716, %v1716
      %v1725 = vmul.f32 %v1717, %v1717
      %v1726 = vmul.f32 %v1718, %v1718
      %v1727 = vmul.f32 %v1719, %v1719
      %v1728 = vmul.f32 %v1720, %v1720
      %v1729 = vmul.f32 %v1721, %v1721
      %v1730 = vmul.f32 %v1722, %v1722
      %v1731 = vmul.f32 %v1723, %v1723
      %1732 = vadd.xlane.f32.xlu0 %v1724
      %v1733 = vpop.xlane.xlu0 %1732
      %1734 = vadd.xlane.f32.xlu0 %v1725
      %v1735 = vpop.xlane.xlu0 %1734
      %1736 = vadd.xlane.f32.xlu0 %v1726
      %v1737 = vpop.xlane.xlu0 %1736
      %1738 = vadd.xlane.f32.xlu0 %v1727
      %v1739 = vpop.xlane.xlu0 %1738
      %1740 = vadd.xlane.f32.xlu0 %v1728
      %v1741 = vpop.xlane.xlu0 %1740
      %1742 = vadd.xlane.f32.xlu0 %v1729
      %v1743 = vpop.xlane.xlu0 %1742
      %1744 = vadd.xlane.f32.xlu0 %v1730
      %v1745 = vpop.xlane.xlu0 %1744
      %1746 = vadd.xlane.f32.xlu0 %v1731
      %v1747 = vpop.xlane.xlu0 %1746
      %v1748 = vmul.f32 %v1733, %v1268
      %v1749 = vmul.f32 %v1735, %v1268
      %v1750 = vmul.f32 %v1737, %v1268
      %v1751 = vmul.f32 %v1739, %v1268
      %v1752 = vmul.f32 %v1741, %v1268
      %v1753 = vmul.f32 %v1743, %v1268
      %v1754 = vmul.f32 %v1745, %v1268
      %v1755 = vmul.f32 %v1747, %v1268
      %v1756 = vadd.f32 %v1748, 1e-05
      %v1757 = vadd.f32 %v1749, 1e-05
      %v1758 = vadd.f32 %v1750, 1e-05
      %v1759 = vadd.f32 %v1751, 1e-05
      %v1760 = vadd.f32 %v1752, 1e-05
      %v1761 = vadd.f32 %v1753, 1e-05
      %v1762 = vadd.f32 %v1754, 1e-05
      %v1763 = vadd.f32 %v1755, 1e-05
      %v1764 = vrsqrt.pop %v1756
      %v1765 = vrsqrt.pop %v1757
      %v1766 = vrsqrt.pop %v1758
      %v1767 = vrsqrt.pop %v1759
      %v1768 = vrsqrt.pop %v1760
      %v1769 = vrsqrt.pop %v1761
      %v1770 = vrsqrt.pop %v1762
      %v1771 = vrsqrt.pop %v1763
      %v1772 = vmul.f32 %v1716, %v1764
      %v1773 = vmul.f32 %v1717, %v1765
      %v1774 = vmul.f32 %v1718, %v1766
      %v1775 = vmul.f32 %v1719, %v1767
      %v1776 = vmul.f32 %v1720, %v1768
      %v1777 = vmul.f32 %v1721, %v1769
      %v1778 = vmul.f32 %v1722, %v1770
      %v1779 = vmul.f32 %v1723, %v1771
      %v1780 = vmul.f32 %v1772, %v1344
      %v1781 = vmul.f32 %v1773, %v1344
      %v1782 = vmul.f32 %v1774, %v1344
      %v1783 = vmul.f32 %v1775, %v1344
      %v1784 = vmul.f32 %v1776, %v1344
      %v1785 = vmul.f32 %v1777, %v1344
      %v1786 = vmul.f32 %v1778, %v1344
      %v1787 = vmul.f32 %v1779, %v1344
      %v1788 = vadd.f32 %v1780, %v1356
      %v1789 = vadd.f32 %v1781, %v1356
      %v1790 = vadd.f32 %v1782, %v1356
      %v1791 = vadd.f32 %v1783, %v1356
      %v1792 = vadd.f32 %v1784, %v1356
      %v1793 = vadd.f32 %v1785, %v1356
      %v1794 = vadd.f32 %v1786, %v1356
      %v1795 = vadd.f32 %v1787, %v1356
      %v1796 = vadd.f32 %v1788, %v1367
      %v1797 = vadd.f32 %v1789, %v1368
      %v1798 = vadd.f32 %v1790, %v1369
      %v1799 = vadd.f32 %v1791, %v1370
      %v1800 = vadd.f32 %v1792, %v1371
      %v1801 = vadd.f32 %v1793, %v1372
      %v1802 = vadd.f32 %v1794, %v1373
      %v1803 = vadd.f32 %v1795, %v1374
      %1804 = vst [vmem:[%s364] sm:$0xff] %v1796
      %1805 = vst [vmem:[%s364 + $0x8] sm:$0xff] %v1797
      %1806 = vst [vmem:[%s364 + $0x10] sm:$0xff] %v1798
      %1807 = vst [vmem:[%s364 + $0x18] sm:$0xff] %v1799
      %1808 = vst [vmem:[%s364 + $0x20] sm:$0xff] %v1800
      %1809 = vst [vmem:[%s364 + $0x28] sm:$0xff] %v1801
      %1810 = vst [vmem:[%s364 + $0x30] sm:$0xff] %v1802
      %1811 = vst [vmem:[%s364 + $0x38] sm:$0xff] %v1803
      %s1812 = smul.u32 4, %s20
      %p1813 = scmp.lt.s32.totalorder %s1812, 7
      %s1814 = scalar_select %p1813, %s1812, 7
      %s1815 = smul.addr %s1814, 2
      %s1816 = smul.addr %s1815, 8
      %s1817 = scalar_lea.vmem %s9, %s1816
      // Predicated region
      $region57: #{_lambda_.3} parent=55 // pred_check
        %p1818 = pneg %p237
      $region58: #{_lambda_.3} parent=55 // pred_check_branch
        %1820 = sbr.rel (%p1818) target = $region60
      $region59: #{_lambda_.3} parent=55 // pred_region
        %s1821 = smul.u32 4, %s20
      $region60: #{_lambda_.3} parent=55 // pred_fallthru
        _
    $region56: #{_lambda_.3} parent=5 // pred_fallthru
      _
    %p1822 = scmp.le.s32.totalorder 2, %s15
    // Predicated region
    $region61: #{_lambda_.3} parent=5 // pred_check
      %p1823 = pneg %p1822
    $region62: #{_lambda_.3} parent=5 // pred_check_branch
      %1825 = sbr.rel (%p1823) target = $region64
    $region63: #{_lambda_.3} parent=5 // pred_region
      %s1826 = ssub.s32 %s15, 2
      // Predicated region
      $region65: #{_lambda_.3} parent=63 // pred_check
        %p1827 = pneg %p243
      $region66: #{_lambda_.3} parent=63 // pred_check_branch
        %1829 = sbr.rel (%p1827) target = $region68
      $region67: #{_lambda_.3} parent=63 // pred_region
        %s1830 = smul.u32 4, %s21
        %p1831 = scmp.lt.s32.totalorder %s1830, 7
        %s1832 = scalar_select %p1831, %s1830, 7
        %s1833 = smul.addr %s1832, 2
        %s1834 = smul.addr %s1833, 8
        %s1835 = scalar_lea.vmem %s9, %s1834
      $region68: #{_lambda_.3} parent=63 // pred_fallthru
        _
    $region64: #{_lambda_.3} parent=5 // pred_fallthru
      _
  $region6: #{_lambda_.3} parent=0 // loop_footer
    %s19 = sadd.s32 1, %s15
  $region7: #{_lambda_.3} parent=0 // loop_footer_branch
    %14 = sbr.rel target = $region3
  $region8: #{_lambda_.3} parent=0 // loop_exit
    _

</llo_original>
